<compile_context>
chip_gen: v7x
topology: tpu7x:2x2x1
jax: 0.10.0
libtpu: 0.0.40
codegen_flags: <defaults>
</compile_context>

<pallas_src>
import functools
import math

import jax
import jax.numpy as jnp
from jax.experimental import pallas as pl
from jax.experimental.pallas import tpu as pltpu


def _round_up(x, m):
    return (x + m - 1) // m * m


def _vmem_capacity_bytes():
    try:
        return int(pltpu.get_tpu_info().vmem_capacity_bytes)
    except Exception:
        return 64 << 20          # conservative (v7x-sized) fallback


def _default_compute_dtype(n):
    # bf16 transcendentals only help on chips with a bf16 EUP (v6e and later)
    # and only when N is large enough to be transcendental-bound.
    if n < 512:
        return jnp.float32
    try:
        kind = jax.devices()[0].device_kind.lower()
    except Exception:
        return jnp.float32
    if any(v in kind for v in ("v2", "v3", "v4", "v5")):
        return jnp.float32
    return jnp.bfloat16


def _softrank_kernel(ti_ref, tj_ref, x_i_ref, x_j_ref, o_ref, acc_ref, *,
                     scale, n_pad, tn, num_tiles, compute_dtype):
    """One (row_tile, tile_pair) grid step.

    ti_ref/tj_ref: SMEM int32 lists of upper-triangular tile pairs (prefetch)
    x_i_ref:       (TB, TN)   x slice for the "i" tile of this pair
    x_j_ref:       (TB, TN)   x slice for the "j" tile of this pair
    o_ref:         (TB, n_pad) full-row output block (resident across pairs)
    acc_ref:       (num_tiles, TB, TN) float32 accumulator of sum_m tanh(...)
    """
    p = pl.program_id(1)

    @pl.when(p == 0)
    def _():
        acc_ref[...] = jnp.zeros_like(acc_ref)

    ti = ti_ref[p]
    tj = tj_ref[p]

    # Hoist the 1/(2*tau) scale onto the O(N) slices, not the O(N^2) block.
    xi = x_i_ref[...].astype(jnp.float32) * scale          # (TB, TN) lanes = i
    xj = x_j_ref[...].astype(jnp.float32) * scale          # (TB, TN) lanes = j

    # Pairwise block with j on the sublane axis and i on the lane axis.
    # Difference in f32; only the tanh argument is (optionally) cast to bf16.
    d = xj[:, :, None] - xi[:, None, :]                     # (TB, TN_j, TN_i)
    if compute_dtype != jnp.float32:
        d = d.astype(compute_dtype)
    t = jnp.tanh(d)                                         # one EUP push / pair

    # i-tile contribution: sum over j (sublane axis) -> lane-dense in i (VALU).
    acc_ref[ti] += jnp.sum(t, axis=1, dtype=jnp.float32)

    # j-tile contribution via antisymmetry: tanh(x_i - x_j) = -tanh(x_j - x_i).
    # Skipped on diagonal tiles (would double count).
    @pl.when(ti != tj)
    def _():
        acc_ref[tj] += -jnp.sum(t, axis=2, dtype=jnp.float32)

    @pl.when(p == pl.num_programs(1) - 1)
    def _():
        # sum_m sigmoid = 0.5*n_pad + 0.5*sum_m tanh ; +1 for the rank offset.
        # (Sentinel-padded columns contribute tanh == -1, i.e. sigmoid == 0.)
        base = 1.0 + 0.5 * n_pad
        for k in range(num_tiles):
            o_ref[:, k * tn:(k + 1) * tn] = (
                base + 0.5 * acc_ref[k]).astype(o_ref.dtype)


def soft_rank(x, tau=1.0, compute_dtype=None):
    """SoftRank over the last axis of x; matches the PyTorch SoftRank module."""
    orig_shape = x.shape
    n = int(orig_shape[-1])
    rows = int(math.prod(orig_shape[:-1]))
    x2 = x.reshape(rows, n)

    if compute_dtype is None:
        compute_dtype = _default_compute_dtype(n)
    compute_dtype = jnp.dtype(compute_dtype)
    itemsize = x2.dtype.itemsize

    # ---- lane tiling ------------------------------------------------------
    n_pad = _round_up(n, 128)
    tn = 256 if n_pad % 256 == 0 else 128
    num_tiles = n_pad // tn
    pairs = [(i, j) for i in range(num_tiles) for j in range(i, num_tiles)]
    num_pairs = len(pairs)
    ti_arr = jnp.asarray([p[0] for p in pairs], dtype=jnp.int32)
    tj_arr = jnp.asarray([p[1] for p in pairs], dtype=jnp.int32)

    # ---- row tiling: size the pairwise block to the chip's VMEM ------------
    vmem_cap = _vmem_capacity_bytes()
    big_vmem = vmem_cap >= (100 << 20)                 # v5e/v6e have 128 MiB
    pair_budget = (32 << 20) if big_vmem else (16 << 20)
    # f32: d(f32)+t(f32); bf16: d(f32)+t(bf16)+f32 upcast for the reduction.
    bytes_per_pair_elem = 8 if compute_dtype == jnp.float32 else 10
    tb = pair_budget // (tn * tn * bytes_per_pair_elem)
    tb = max(8, min(64, tb // 8 * 8))
    tb = min(tb, _round_up(rows, 8))
    if rows >= 16:
        # Keep >= 2 row tiles so the "parallel" axis can feed both v7x cores.
        tb = min(tb, _round_up((rows + 1) // 2, 8))

    def _need_bytes(tb_):
        return (tb_ * tn * tn * bytes_per_pair_elem     # pairwise temporaries
                + num_tiles * tb_ * tn * 4               # accumulator scratch
                + 2 * tb_ * n_pad * itemsize             # output block (2 bufs)
                + 4 * tb_ * tn * itemsize                # inputs (2 specs x 2)
                + (4 << 20))                             # slack

    while tb > 8 and _need_bytes(tb) > int(vmem_cap * 0.7):
        tb -= 8
    rows_pad = _round_up(rows, tb)

    # ---- padding with a finite negative sentinel ----------------------------
    # tanh(scale*(sentinel - x_i)) saturates to exactly -1, so padded columns
    # contribute sigmoid == 0 with no per-step mask; (sentinel - sentinel) == 0
    # so padded rows/cols never produce NaN.
    if rows_pad != rows or n_pad != n:
        sentinel = (jnp.min(x2.astype(jnp.float32))
                    - (64.0 * float(tau) + 1.0)).astype(x2.dtype)
        xp = jnp.full((rows_pad, n_pad), sentinel, dtype=x2.dtype)
        x2 = xp.at[:rows, :n].set(x2)

    grid = (rows_pad // tb, num_pairs)

    kernel = functools.partial(
        _softrank_kernel,
        scale=0.5 / float(tau),
        n_pad=n_pad,
        tn=tn,
        num_tiles=num_tiles,
        compute_dtype=compute_dtype,
    )

    # Explicit VMEM limit (v5e's scoped default is only 16 MiB).
    need = _need_bytes(tb)
    vmem_limit = int(min(max(need + (8 << 20), 32 << 20), int(vmem_cap * 0.85)))

    pair_elems = rows_pad * (n_pad * (n_pad + tn)) // 2   # upper-tri tile pairs
    cost = pl.CostEstimate(
        flops=4 * pair_elems,
        transcendentals=pair_elems,
        bytes_accessed=(2 * rows_pad * tn * num_pairs + 2 * rows_pad * n_pad)
        * itemsize,
    )

    out2 = pl.pallas_call(
        kernel,
        out_shape=jax.ShapeDtypeStruct((rows_pad, n_pad), x.dtype),
        grid_spec=pltpu.PrefetchScalarGridSpec(
            num_scalar_prefetch=2,
            grid=grid,
            in_specs=[
                pl.BlockSpec((tb, tn), lambda r, p, ti, tj: (r, ti[p])),  # i slice
                pl.BlockSpec((tb, tn), lambda r, p, ti, tj: (r, tj[p])),  # j slice
            ],
            out_specs=pl.BlockSpec((tb, n_pad), lambda r, p, ti, tj: (r, 0)),
            scratch_shapes=[pltpu.VMEM((num_tiles, tb, tn), jnp.float32)],
        ),
        compiler_params=pltpu.CompilerParams(
            dimension_semantics=("parallel", "arbitrary"),
            vmem_limit_bytes=vmem_limit,
        ),
        cost_estimate=cost,
    )(ti_arr, tj_arr, x2, x2)

    if rows_pad != rows or n_pad != n:
        out2 = out2[:rows, :n]
    return out2.reshape(orig_shape)


def _soft_rank_ref(x, tau=1.0):
    diff = x[..., :, None] - x[..., None, :]
    return 1.0 + jnp.sum(jax.nn.sigmoid(-diff / tau), axis=-1)


if __name__ == "__main__":
    key = jax.random.PRNGKey(0)

    # (batch=2, heads=4, seq=16): soft-rank over the last (seq) axis.
    x = jax.random.normal(key, (2, 4, 16), dtype=jnp.float32)
    out = jax.block_until_ready(soft_rank(x, tau=1.0))
    ref = _soft_rank_ref(x, tau=1.0)
    assert out.shape == x.shape, (out.shape, x.shape)
    assert jnp.allclose(out, ref, atol=1e-4, rtol=1e-5), "mismatch (2,4,16)"

    # Row padding (3 -> 8) and sentinel lane padding (40 -> 128).
    x_b = jax.random.normal(jax.random.PRNGKey(1), (3, 40), dtype=jnp.float32)
    out_b = jax.block_until_ready(soft_rank(x_b, tau=0.5))
    ref_b = _soft_rank_ref(x_b, tau=0.5)
    assert out_b.shape == x_b.shape, (out_b.shape, x_b.shape)
    assert jnp.allclose(out_b, ref_b, atol=1e-4, rtol=1e-5), "mismatch (3,40)"

    # Multi-tile triangular sweep (n_pad=384 -> 3 lane tiles, 6 tile pairs) plus
    # two row tiles; forced f32 compute for a tight check.
    x_c = jax.random.normal(jax.random.PRNGKey(2), (20, 300), dtype=jnp.float32)
    out_c = jax.block_until_ready(
        soft_rank(x_c, tau=0.7, compute_dtype=jnp.float32))
    ref_c = _soft_rank_ref(x_c, tau=0.7)
    assert out_c.shape == x_c.shape, (out_c.shape, x_c.shape)
    assert jnp.allclose(out_c, ref_c, atol=1e-3, rtol=1e-5), "mismatch (20,300)"

    # Auto compute dtype (bf16 tanh on v6e/v7x, f32 elsewhere): loose sanity check.
    x_d = jax.random.normal(jax.random.PRNGKey(3), (4, 600), dtype=jnp.float32)
    out_d = jax.block_until_ready(soft_rank(x_d, tau=1.0))
    ref_d = _soft_rank_ref(x_d, tau=1.0)
    assert out_d.shape == x_d.shape, (out_d.shape, x_d.shape)
    assert jnp.allclose(out_d, ref_d, atol=3.0, rtol=2e-2), "mismatch (4,600)"

    print("KERNEL_OK")
</pallas_src>

<mosaic_0001>
module attributes {stable_mosaic.version = 11 : i64} {
  func.func @_softrank_kernel(%arg0: i32, %arg1: i32, %arg2: memref<1xi32, #tpu.memory_space<smem>>, %arg3: memref<1xi32, #tpu.memory_space<smem>>, %arg4: memref<8x128xf32, #tpu.memory_space<vmem>>, %arg5: memref<8x128xf32, #tpu.memory_space<vmem>>, %arg6: memref<8x128xf32, #tpu.memory_space<vmem>>, %arg7: memref<1x8x128xf32, #tpu.memory_space<vmem>>) attributes {dimension_semantics = [#tpu.dimension_semantics<parallel>, #tpu.dimension_semantics<arbitrary>], iteration_bounds = array<i64: 1, 1>, scalar_prefetch = 2 : i64, scratch_operands = 1 : i64, tpu.core_type = #tpu.core_type<tc>, window_params = [{transform_indices = @transform_0, window_bounds = array<i64: 8, 128>}, {transform_indices = @transform_1, window_bounds = array<i64: 8, 128>}, {transform_indices = @transform_2, window_bounds = array<i64: 8, 128>}]} {
    %c0_i32 = arith.constant 0 : i32
    %0 = arith.cmpi eq, %arg1, %c0_i32 : i32
    %1 = arith.extui %0 : i1 to i32
    %c0_i32_0 = arith.constant 0 : i32
    %2 = arith.cmpi ne, %1, %c0_i32_0 : i32
    scf.if %2 {
      %cst_13 = arith.constant 0.000000e+00 : f32
      %34 = vector.broadcast %cst_13 : f32 to vector<1x8x128xf32>
      %c0_14 = arith.constant 0 : index
      %c0_15 = arith.constant 0 : index
      %c0_16 = arith.constant 0 : index
      %35 = vector.load %arg7[%c0_14, %c0_15, %c0_16] : memref<1x8x128xf32, #tpu.memory_space<vmem>>, vector<1x8x128xf32>
      tpu.vector_store %arg7[%c0_14, %c0_15, %c0_16], %34 {strides = array<i32>} : memref<1x8x128xf32, #tpu.memory_space<vmem>>, vector<1x8x128xf32>,
    } else {
    }
    %3 = arith.index_cast %arg1 : i32 to index
    %4 = memref.load %arg2[%3] : memref<1xi32, #tpu.memory_space<smem>>
    %5 = arith.index_cast %arg1 : i32 to index
    %6 = memref.load %arg3[%5] : memref<1xi32, #tpu.memory_space<smem>>
    %c0 = arith.constant 0 : index
    %c0_1 = arith.constant 0 : index
    %7 = vector.load %arg4[%c0, %c0_1] : memref<8x128xf32, #tpu.memory_space<vmem>>, vector<8x128xf32>
    %cst = arith.constant 5.000000e-01 : f32
    %8 = vector.broadcast %cst : f32 to vector<8x128xf32>
    %9 = arith.mulf %7, %8 : vector<8x128xf32>
    %c0_2 = arith.constant 0 : index
    %c0_3 = arith.constant 0 : index
    %10 = vector.load %arg5[%c0_2, %c0_3] : memref<8x128xf32, #tpu.memory_space<vmem>>, vector<8x128xf32>
    %cst_4 = arith.constant 5.000000e-01 : f32
    %11 = vector.broadcast %cst_4 : f32 to vector<8x128xf32>
    %12 = arith.mulf %10, %11 : vector<8x128xf32>
    %13 = vector.shape_cast %12 : vector<8x128xf32> to vector<8x128x1xf32>
    %14 = vector.shape_cast %9 : vector<8x128xf32> to vector<8x1x128xf32>
    %15 = vector.broadcast %13 : vector<8x128x1xf32> to vector<8x128x128xf32>
    %16 = vector.broadcast %14 : vector<8x1x128xf32> to vector<8x128x128xf32>
    %17 = arith.subf %15, %16 : vector<8x128x128xf32>
    %18 = math.tanh %17 : vector<8x128x128xf32>
    %19 = arith.index_cast %4 : i32 to index
    %c0_5 = arith.constant 0 : index
    %c0_6 = arith.constant 0 : index
    %20 = vector.load %arg7[%19, %c0_5, %c0_6] : memref<1x8x128xf32, #tpu.memory_space<vmem>>, vector<1x8x128xf32>
    %21 = vector.shape_cast %20 : vector<1x8x128xf32> to vector<8x128xf32>
    %cst_7 = arith.constant dense<0.000000e+00> : vector<8x128xf32>
    %22 = vector.multi_reduction <add>, %18, %cst_7 [1] : vector<8x128x128xf32> to vector<8x128xf32>
    %23 = arith.addf %21, %22 : vector<8x128xf32>
    %24 = arith.index_cast %4 : i32 to index
    %c0_8 = arith.constant 0 : index
    %c0_9 = arith.constant 0 : index
    %25 = vector.load %arg7[%24, %c0_8, %c0_9] : memref<1x8x128xf32, #tpu.memory_space<vmem>>, vector<1x8x128xf32>
    %26 = vector.shape_cast %25 : vector<1x8x128xf32> to vector<8x128xf32>
    %27 = vector.shape_cast %23 : vector<8x128xf32> to vector<1x8x128xf32>
    tpu.vector_store %arg7[%24, %c0_8, %c0_9], %27 {strides = array<i32>} : memref<1x8x128xf32, #tpu.memory_space<vmem>>, vector<1x8x128xf32>,
    %28 = arith.cmpi ne, %4, %6 : i32
    %29 = arith.extui %28 : i1 to i32
    %c0_i32_10 = arith.constant 0 : i32
    %30 = arith.cmpi ne, %29, %c0_i32_10 : i32
    scf.if %30 {
      %34 = arith.index_cast %6 : i32 to index
      %c0_13 = arith.constant 0 : index
      %c0_14 = arith.constant 0 : index
      %35 = vector.load %arg7[%34, %c0_13, %c0_14] : memref<1x8x128xf32, #tpu.memory_space<vmem>>, vector<1x8x128xf32>
      %36 = vector.shape_cast %35 : vector<1x8x128xf32> to vector<8x128xf32>
      %cst_15 = arith.constant dense<0.000000e+00> : vector<8x128xf32>
      %37 = vector.multi_reduction <add>, %18, %cst_15 [2] : vector<8x128x128xf32> to vector<8x128xf32>
      %cst_16 = arith.constant 0.000000e+00 : f32
      %38 = vector.broadcast %cst_16 : f32 to vector<8x128xf32>
      %39 = arith.subf %38, %37 : vector<8x128xf32>
      %40 = arith.addf %36, %39 : vector<8x128xf32>
      %41 = arith.index_cast %6 : i32 to index
      %c0_17 = arith.constant 0 : index
      %c0_18 = arith.constant 0 : index
      %42 = vector.load %arg7[%41, %c0_17, %c0_18] : memref<1x8x128xf32, #tpu.memory_space<vmem>>, vector<1x8x128xf32>
      %43 = vector.shape_cast %42 : vector<1x8x128xf32> to vector<8x128xf32>
      %44 = vector.shape_cast %40 : vector<8x128xf32> to vector<1x8x128xf32>
      tpu.vector_store %arg7[%41, %c0_17, %c0_18], %44 {strides = array<i32>} : memref<1x8x128xf32, #tpu.memory_space<vmem>>, vector<1x8x128xf32>,
    } else {
    }
    %c0_i32_11 = arith.constant 0 : i32
    %31 = arith.cmpi eq, %arg1, %c0_i32_11 : i32
    %32 = arith.extui %31 : i1 to i32
    %c0_i32_12 = arith.constant 0 : i32
    %33 = arith.cmpi ne, %32, %c0_i32_12 : i32
    scf.if %33 {
      %c0_13 = arith.constant 0 : index
      %c0_14 = arith.constant 0 : index
      %c0_15 = arith.constant 0 : index
      %34 = vector.load %arg7[%c0_13, %c0_14, %c0_15] : memref<1x8x128xf32, #tpu.memory_space<vmem>>, vector<1x8x128xf32>
      %35 = vector.shape_cast %34 : vector<1x8x128xf32> to vector<8x128xf32>
      %cst_16 = arith.constant 5.000000e-01 : f32
      %36 = vector.broadcast %cst_16 : f32 to vector<8x128xf32>
      %37 = arith.mulf %36, %35 : vector<8x128xf32>
      %cst_17 = arith.constant 6.500000e+01 : f32
      %38 = vector.broadcast %cst_17 : f32 to vector<8x128xf32>
      %39 = arith.addf %38, %37 : vector<8x128xf32>
      %c0_18 = arith.constant 0 : index
      %c0_19 = arith.constant 0 : index
      %40 = vector.load %arg6[%c0_18, %c0_19] : memref<8x128xf32, #tpu.memory_space<vmem>>, vector<8x128xf32>
      tpu.vector_store %arg6[%c0_18, %c0_19], %39 {strides = array<i32>} : memref<8x128xf32, #tpu.memory_space<vmem>>, vector<8x128xf32>,
    } else {
    }
    return
  }
  func.func @transform_0(%arg0: i32, %arg1: i32, %arg2: memref<1xi32, #tpu.memory_space<smem>>, %arg3: memref<1xi32, #tpu.memory_space<smem>>) -> (i32, i32) {
    %0 = arith.index_cast %arg1 : i32 to index
    %1 = memref.load %arg2[%0] : memref<1xi32, #tpu.memory_space<smem>>
    %c0_i32 = arith.constant 0 : i32
    return %arg0, %1 : i32, i32
  }
  func.func @transform_1(%arg0: i32, %arg1: i32, %arg2: memref<1xi32, #tpu.memory_space<smem>>, %arg3: memref<1xi32, #tpu.memory_space<smem>>) -> (i32, i32) {
    %0 = arith.index_cast %arg1 : i32 to index
    %1 = memref.load %arg3[%0] : memref<1xi32, #tpu.memory_space<smem>>
    %c0_i32 = arith.constant 0 : i32
    return %arg0, %1 : i32, i32
  }
  func.func @transform_2(%arg0: i32, %arg1: i32, %arg2: memref<1xi32, #tpu.memory_space<smem>>, %arg3: memref<1xi32, #tpu.memory_space<smem>>) -> (i32, i32) {
    %c0_i32 = arith.constant 0 : i32
    %c0_i32_0 = arith.constant 0 : i32
    return %arg0, %c0_i32 : i32, i32
  }
}

</mosaic_0001>

<llo_original>
// kernel: tpu_custom_call.1
$region0: #{tpu_custom_call.1}
  #allocation0 [shape = 'u32[]', space=smem, size = 0x4, offset = 0x4, fixed_abs, tag = 'smem constant byte address 0x4 - core index']
  #allocation1 [shape = 'u32[144,128]{1,0:T(1,128)}', space=vmem, size = 0x12000, scoped, tag = 'internal scratch']
  #allocation2 [shape = 'f32[1,8,128]{2,1,0:T(8,128)}', space=vmem, size = 0x1000, scoped, tag = 'scratch operand']
  #allocation3 [shape = 's32[1]{0}', space=sflag, size = 0x4, scoped, tag = 'scoped memory for tpu_custom_call.1']
  #allocation4 [shape = 's32[1]{0:T(128)S(6)}', space=smem, size = 0x200, scoped, tag = 'prefetched SMEM operand 0']
  #allocation5 [shape = 's32[1]{0:T(128)S(6)}', space=smem, size = 0x200, scoped, tag = 'prefetched SMEM operand 1']
  %s0 = inlined_call_operand.<no memory space> [shape: s32[1], index: 0, kind: input, shape index: {}]
  %s1 = inlined_call_operand.<no memory space> [shape: s32[1], index: 1, kind: input, shape index: {}]
  %s2 = inlined_call_operand.hbm [shape: f32[8,128], index: 2, kind: input, shape index: {}]
  %s3 = inlined_call_operand.vmem [shape: f32[8,128], index: 3, kind: input, shape index: {}]
  %s4 = inlined_call_operand.hbm [shape: f32[8,128], index: 4, kind: output, shape index: {}]
  %s5 = sld [smem:[#allocation0]]
  $region34: #{tpu_custom_call.1} parent=0
    _
  %s7 = ssub.s32 1, %s5
  %s8 = scalar_select 0, %s7, %s5
  %9 = sst [smem:[#allocation4]] %s0
  %10 = sst [smem:[#allocation5]] %s1
  $region1: #{tpu_custom_call.1} parent=0
    #allocation6 [shape = 'u8[4096]{0}', space=vmem, size = 0x1000, scoped, tag = 'input window, operand 2, single buffered']
    #allocation7 [shape = 's32[1]{0}', space=sflag, size = 0x4, scoped, tag = 'scoped memory for tpu_custom_call.1']
    #allocation8 [shape = 's32[1]{0}', space=sflag, size = 0x4, scoped, tag = 'scoped memory for tpu_custom_call.1']
    #allocation9 [shape = 'u8[4096]{0}', space=vmem, size = 0x1000, scoped, tag = 'output window, operand 0, single buffered']
    %11 = vsyncpa [#allocation7], 0
    %12 = vsyncpa [#allocation8], 0
    // Predicated region
    $region2: #{tpu_custom_call.1} parent=1 // pred_check
      _
    $region3: #{tpu_custom_call.1} parent=1 // pred_check_branch
      %14 = sbr.rel (0) target = $region5
    $region4: #{tpu_custom_call.1} parent=1 // pred_region
      %s15 = sld [smem:[#allocation4]]
      %s17 = ssub.s32 128, 128
      %18 = vsyncadd [#allocation7], %s17
      %s19 = smul.addr %s15, 128
      %s20 = scalar_lea.hbm %s2, %s19
      %s22 = sshll.u32 [#allocation6], 4
      %s23 = int_to_ptr.vmem [resolvable:$true] %s22
      %25 = dma.hbm_to_vmem [thread:$0]  %s20, 128, %s23, [#allocation7]
    $region5: #{tpu_custom_call.1} parent=1 // pred_fallthru
      _
    // Predicated region
    $region6: #{tpu_custom_call.1} parent=1 // pred_check
      _
    $region7: #{tpu_custom_call.1} parent=1 // pred_check_branch
      %27 = sbr.rel (0) target = $region9
    $region8: #{tpu_custom_call.1} parent=1 // pred_region
      %s28 = sld [smem:[#allocation5]]
      %p29 = scmp.lt.s32.totalorder %s28, 0
      %s30 = scalar_select %p29, %s28, 0
      %s31 = smul.addr %s30, 8
      %s32 = scalar_lea.vmem %s3, %s31
      %s33 = sld [smem:[#allocation5]]
    $region9: #{tpu_custom_call.1} parent=1 // pred_fallthru
      _
    // Predicated region
    $region10: #{tpu_custom_call.1} parent=1 // pred_check
      _
    $region11: #{tpu_custom_call.1} parent=1 // pred_check_branch
      %35 = sbr.rel (0) target = $region13
    $region12: #{tpu_custom_call.1} parent=1 // pred_region
      %36 = dma.done [#allocation7], 128
    $region13: #{tpu_custom_call.1} parent=1 // pred_fallthru
      _
    %s37 = sld [smem:[#allocation5]]
    %p38 = scmp.lt.s32.totalorder %s37, 0
    %s39 = scalar_select %p38, %s37, 0
    %s40 = smul.addr %s39, 8
    %s41 = scalar_lea.vmem %s3, %s40
    %s42 = sld [smem:[#allocation4]]
    %s43 = sld [smem:[#allocation5]]
    %p44 = scmp.lt.s32.totalorder %s43, 0
    %s45 = scalar_select %p44, %s43, 0
    %s46 = smul.addr %s45, 8
    %s47 = scalar_lea.vmem %s3, %s46
    %s48 = sld [smem:[#allocation5]]
    %p49 = scmp.eq.s32.totalorder 0, 0
    // Predicated region
    $region14: #{tpu_custom_call.1} parent=1 // pred_check
      %p50 = pneg %p49
    $region15: #{tpu_custom_call.1} parent=1 // pred_check_branch
      %52 = sbr.rel (%p50) target = $region17
    $region16: #{tpu_custom_call.1} parent=1 // pred_region
      %53 = vst [vmem:[#allocation2] sm:$0xff] 0.0
    $region17: #{tpu_custom_call.1} parent=1 // pred_fallthru
      _
    %s54 = sld [smem:[#allocation4]]
    %s55 = sld [smem:[#allocation5]]
    %v56 = vld [vmem:[#allocation6] sm:$0xff]
    %v57 = vmul.f32 %v56, 0.5
    %v58 = vld [vmem:[%s47] sm:$0xff]
    %v59 = vmul.f32 %v58, 0.5
    %v60 = vlaneseq
    %v61 = vshrl.u32 %v60, 7
    %v62 = vsub.s32 0, %v61
    %v63 = vrot.slane %v59, %v62
    %65 = vbcast.lane.b32.xlu0 %v63, 256
    %v66 = vpop.permute.xlu0 %65
    %s68 = sor.u32 256, 8
    %69 = vbcast.lane.b32.xlu0 %v63, %s68
    %v70 = vpop.permute.xlu0 %69
    %s72 = sor.u32 256, 16
    %73 = vbcast.lane.b32.xlu0 %v63, %s72
    %v74 = vpop.permute.xlu0 %73
    %s76 = sor.u32 256, 24
    %77 = vbcast.lane.b32.xlu0 %v63, %s76
    %v78 = vpop.permute.xlu0 %77
    %s80 = sor.u32 256, 32
    %81 = vbcast.lane.b32.xlu0 %v63, %s80
    %v82 = vpop.permute.xlu0 %81
    %s84 = sor.u32 256, 40
    %85 = vbcast.lane.b32.xlu0 %v63, %s84
    %v86 = vpop.permute.xlu0 %85
    %s88 = sor.u32 256, 48
    %89 = vbcast.lane.b32.xlu0 %v63, %s88
    %v90 = vpop.permute.xlu0 %89
    %s92 = sor.u32 256, 56
    %93 = vbcast.lane.b32.xlu0 %v63, %s92
    %v94 = vpop.permute.xlu0 %93
    %s96 = sor.u32 256, 64
    %97 = vbcast.lane.b32.xlu0 %v63, %s96
    %v98 = vpop.permute.xlu0 %97
    %s100 = sor.u32 256, 72
    %101 = vbcast.lane.b32.xlu0 %v63, %s100
    %v102 = vpop.permute.xlu0 %101
    %s104 = sor.u32 256, 80
    %105 = vbcast.lane.b32.xlu0 %v63, %s104
    %v106 = vpop.permute.xlu0 %105
    %s108 = sor.u32 256, 88
    %109 = vbcast.lane.b32.xlu0 %v63, %s108
    %v110 = vpop.permute.xlu0 %109
    %s112 = sor.u32 256, 96
    %113 = vbcast.lane.b32.xlu0 %v63, %s112
    %v114 = vpop.permute.xlu0 %113
    %s116 = sor.u32 256, 104
    %117 = vbcast.lane.b32.xlu0 %v63, %s116
    %v118 = vpop.permute.xlu0 %117
    %s120 = sor.u32 256, 112
    %121 = vbcast.lane.b32.xlu0 %v63, %s120
    %v122 = vpop.permute.xlu0 %121
    %s124 = sor.u32 256, 120
    %125 = vbcast.lane.b32.xlu0 %v63, %s124
    %v126 = vpop.permute.xlu0 %125
    %v127 = vlaneseq
    %v128 = vshrl.u32 %v127, 7
    %v129 = vsub.s32 1, %v128
    %v130 = vrot.slane %v59, %v129
    %132 = vbcast.lane.b32.xlu0 %v130, 256
    %v133 = vpop.permute.xlu0 %132
    %s135 = sor.u32 256, 8
    %136 = vbcast.lane.b32.xlu0 %v130, %s135
    %v137 = vpop.permute.xlu0 %136
    %s139 = sor.u32 256, 16
    %140 = vbcast.lane.b32.xlu0 %v130, %s139
    %v141 = vpop.permute.xlu0 %140
    %s143 = sor.u32 256, 24
    %144 = vbcast.lane.b32.xlu0 %v130, %s143
    %v145 = vpop.permute.xlu0 %144
    %s147 = sor.u32 256, 32
    %148 = vbcast.lane.b32.xlu0 %v130, %s147
    %v149 = vpop.permute.xlu0 %148
    %s151 = sor.u32 256, 40
    %152 = vbcast.lane.b32.xlu0 %v130, %s151
    %v153 = vpop.permute.xlu0 %152
    %s155 = sor.u32 256, 48
    %156 = vbcast.lane.b32.xlu0 %v130, %s155
    %v157 = vpop.permute.xlu0 %156
    %s159 = sor.u32 256, 56
    %160 = vbcast.lane.b32.xlu0 %v130, %s159
    %v161 = vpop.permute.xlu0 %160
    %s163 = sor.u32 256, 64
    %164 = vbcast.lane.b32.xlu0 %v130, %s163
    %v165 = vpop.permute.xlu0 %164
    %s167 = sor.u32 256, 72
    %168 = vbcast.lane.b32.xlu0 %v130, %s167
    %v169 = vpop.permute.xlu0 %168
    %s171 = sor.u32 256, 80
    %172 = vbcast.lane.b32.xlu0 %v130, %s171
    %v173 = vpop.permute.xlu0 %172
    %s175 = sor.u32 256, 88
    %176 = vbcast.lane.b32.xlu0 %v130, %s175
    %v177 = vpop.permute.xlu0 %176
    %s179 = sor.u32 256, 96
    %180 = vbcast.lane.b32.xlu0 %v130, %s179
    %v181 = vpop.permute.xlu0 %180
    %s183 = sor.u32 256, 104
    %184 = vbcast.lane.b32.xlu0 %v130, %s183
    %v185 = vpop.permute.xlu0 %184
    %s187 = sor.u32 256, 112
    %188 = vbcast.lane.b32.xlu0 %v130, %s187
    %v189 = vpop.permute.xlu0 %188
    %s191 = sor.u32 256, 120
    %192 = vbcast.lane.b32.xlu0 %v130, %s191
    %v193 = vpop.permute.xlu0 %192
    %v194 = vlaneseq
    %v195 = vshrl.u32 %v194, 7
    %v196 = vsub.s32 2, %v195
    %v197 = vrot.slane %v59, %v196
    %199 = vbcast.lane.b32.xlu0 %v197, 256
    %v200 = vpop.permute.xlu0 %199
    %s202 = sor.u32 256, 8
    %203 = vbcast.lane.b32.xlu0 %v197, %s202
    %v204 = vpop.permute.xlu0 %203
    %s206 = sor.u32 256, 16
    %207 = vbcast.lane.b32.xlu0 %v197, %s206
    %v208 = vpop.permute.xlu0 %207
    %s210 = sor.u32 256, 24
    %211 = vbcast.lane.b32.xlu0 %v197, %s210
    %v212 = vpop.permute.xlu0 %211
    %s214 = sor.u32 256, 32
    %215 = vbcast.lane.b32.xlu0 %v197, %s214
    %v216 = vpop.permute.xlu0 %215
    %s218 = sor.u32 256, 40
    %219 = vbcast.lane.b32.xlu0 %v197, %s218
    %v220 = vpop.permute.xlu0 %219
    %s222 = sor.u32 256, 48
    %223 = vbcast.lane.b32.xlu0 %v197, %s222
    %v224 = vpop.permute.xlu0 %223
    %s226 = sor.u32 256, 56
    %227 = vbcast.lane.b32.xlu0 %v197, %s226
    %v228 = vpop.permute.xlu0 %227
    %s230 = sor.u32 256, 64
    %231 = vbcast.lane.b32.xlu0 %v197, %s230
    %v232 = vpop.permute.xlu0 %231
    %s234 = sor.u32 256, 72
    %235 = vbcast.lane.b32.xlu0 %v197, %s234
    %v236 = vpop.permute.xlu0 %235
    %s238 = sor.u32 256, 80
    %239 = vbcast.lane.b32.xlu0 %v197, %s238
    %v240 = vpop.permute.xlu0 %239
    %s242 = sor.u32 256, 88
    %243 = vbcast.lane.b32.xlu0 %v197, %s242
    %v244 = vpop.permute.xlu0 %243
    %s246 = sor.u32 256, 96
    %247 = vbcast.lane.b32.xlu0 %v197, %s246
    %v248 = vpop.permute.xlu0 %247
    %s250 = sor.u32 256, 104
    %251 = vbcast.lane.b32.xlu0 %v197, %s250
    %v252 = vpop.permute.xlu0 %251
    %s254 = sor.u32 256, 112
    %255 = vbcast.lane.b32.xlu0 %v197, %s254
    %v256 = vpop.permute.xlu0 %255
    %s258 = sor.u32 256, 120
    %259 = vbcast.lane.b32.xlu0 %v197, %s258
    %v260 = vpop.permute.xlu0 %259
    %v261 = vlaneseq
    %v262 = vshrl.u32 %v261, 7
    %v263 = vsub.s32 3, %v262
    %v264 = vrot.slane %v59, %v263
    %266 = vbcast.lane.b32.xlu0 %v264, 256
    %v267 = vpop.permute.xlu0 %266
    %s269 = sor.u32 256, 8
    %270 = vbcast.lane.b32.xlu0 %v264, %s269
    %v271 = vpop.permute.xlu0 %270
    %s273 = sor.u32 256, 16
    %274 = vbcast.lane.b32.xlu0 %v264, %s273
    %v275 = vpop.permute.xlu0 %274
    %s277 = sor.u32 256, 24
    %278 = vbcast.lane.b32.xlu0 %v264, %s277
    %v279 = vpop.permute.xlu0 %278
    %s281 = sor.u32 256, 32
    %282 = vbcast.lane.b32.xlu0 %v264, %s281
    %v283 = vpop.permute.xlu0 %282
    %s285 = sor.u32 256, 40
    %286 = vbcast.lane.b32.xlu0 %v264, %s285
    %v287 = vpop.permute.xlu0 %286
    %s289 = sor.u32 256, 48
    %290 = vbcast.lane.b32.xlu0 %v264, %s289
    %v291 = vpop.permute.xlu0 %290
    %s293 = sor.u32 256, 56
    %294 = vbcast.lane.b32.xlu0 %v264, %s293
    %v295 = vpop.permute.xlu0 %294
    %s297 = sor.u32 256, 64
    %298 = vbcast.lane.b32.xlu0 %v264, %s297
    %v299 = vpop.permute.xlu0 %298
    %s301 = sor.u32 256, 72
    %302 = vbcast.lane.b32.xlu0 %v264, %s301
    %v303 = vpop.permute.xlu0 %302
    %s305 = sor.u32 256, 80
    %306 = vbcast.lane.b32.xlu0 %v264, %s305
    %v307 = vpop.permute.xlu0 %306
    %s309 = sor.u32 256, 88
    %310 = vbcast.lane.b32.xlu0 %v264, %s309
    %v311 = vpop.permute.xlu0 %310
    %s313 = sor.u32 256, 96
    %314 = vbcast.lane.b32.xlu0 %v264, %s313
    %v315 = vpop.permute.xlu0 %314
    %s317 = sor.u32 256, 104
    %318 = vbcast.lane.b32.xlu0 %v264, %s317
    %v319 = vpop.permute.xlu0 %318
    %s321 = sor.u32 256, 112
    %322 = vbcast.lane.b32.xlu0 %v264, %s321
    %v323 = vpop.permute.xlu0 %322
    %s325 = sor.u32 256, 120
    %326 = vbcast.lane.b32.xlu0 %v264, %s325
    %v327 = vpop.permute.xlu0 %326
    %v328 = vlaneseq
    %v329 = vshrl.u32 %v328, 7
    %v330 = vsub.s32 4, %v329
    %v331 = vrot.slane %v59, %v330
    %333 = vbcast.lane.b32.xlu0 %v331, 256
    %v334 = vpop.permute.xlu0 %333
    %s336 = sor.u32 256, 8
    %337 = vbcast.lane.b32.xlu0 %v331, %s336
    %v338 = vpop.permute.xlu0 %337
    %s340 = sor.u32 256, 16
    %341 = vbcast.lane.b32.xlu0 %v331, %s340
    %v342 = vpop.permute.xlu0 %341
    %s344 = sor.u32 256, 24
    %345 = vbcast.lane.b32.xlu0 %v331, %s344
    %v346 = vpop.permute.xlu0 %345
    %s348 = sor.u32 256, 32
    %349 = vbcast.lane.b32.xlu0 %v331, %s348
    %v350 = vpop.permute.xlu0 %349
    %s352 = sor.u32 256, 40
    %353 = vbcast.lane.b32.xlu0 %v331, %s352
    %v354 = vpop.permute.xlu0 %353
    %s356 = sor.u32 256, 48
    %357 = vbcast.lane.b32.xlu0 %v331, %s356
    %v358 = vpop.permute.xlu0 %357
    %s360 = sor.u32 256, 56
    %361 = vbcast.lane.b32.xlu0 %v331, %s360
    %v362 = vpop.permute.xlu0 %361
    %s364 = sor.u32 256, 64
    %365 = vbcast.lane.b32.xlu0 %v331, %s364
    %v366 = vpop.permute.xlu0 %365
    %s368 = sor.u32 256, 72
    %369 = vbcast.lane.b32.xlu0 %v331, %s368
    %v370 = vpop.permute.xlu0 %369
    %s372 = sor.u32 256, 80
    %373 = vbcast.lane.b32.xlu0 %v331, %s372
    %v374 = vpop.permute.xlu0 %373
    %s376 = sor.u32 256, 88
    %377 = vbcast.lane.b32.xlu0 %v331, %s376
    %v378 = vpop.permute.xlu0 %377
    %s380 = sor.u32 256, 96
    %381 = vbcast.lane.b32.xlu0 %v331, %s380
    %v382 = vpop.permute.xlu0 %381
    %s384 = sor.u32 256, 104
    %385 = vbcast.lane.b32.xlu0 %v331, %s384
    %v386 = vpop.permute.xlu0 %385
    %s388 = sor.u32 256, 112
    %389 = vbcast.lane.b32.xlu0 %v331, %s388
    %v390 = vpop.permute.xlu0 %389
    %s392 = sor.u32 256, 120
    %393 = vbcast.lane.b32.xlu0 %v331, %s392
    %v394 = vpop.permute.xlu0 %393
    %v395 = vlaneseq
    %v396 = vshrl.u32 %v395, 7
    %v397 = vsub.s32 5, %v396
    %v398 = vrot.slane %v59, %v397
    %400 = vbcast.lane.b32.xlu0 %v398, 256
    %v401 = vpop.permute.xlu0 %400
    %s403 = sor.u32 256, 8
    %404 = vbcast.lane.b32.xlu0 %v398, %s403
    %v405 = vpop.permute.xlu0 %404
    %s407 = sor.u32 256, 16
    %408 = vbcast.lane.b32.xlu0 %v398, %s407
    %v409 = vpop.permute.xlu0 %408
    %s411 = sor.u32 256, 24
    %412 = vbcast.lane.b32.xlu0 %v398, %s411
    %v413 = vpop.permute.xlu0 %412
    %s415 = sor.u32 256, 32
    %416 = vbcast.lane.b32.xlu0 %v398, %s415
    %v417 = vpop.permute.xlu0 %416
    %s419 = sor.u32 256, 40
    %420 = vbcast.lane.b32.xlu0 %v398, %s419
    %v421 = vpop.permute.xlu0 %420
    %s423 = sor.u32 256, 48
    %424 = vbcast.lane.b32.xlu0 %v398, %s423
    %v425 = vpop.permute.xlu0 %424
    %s427 = sor.u32 256, 56
    %428 = vbcast.lane.b32.xlu0 %v398, %s427
    %v429 = vpop.permute.xlu0 %428
    %s431 = sor.u32 256, 64
    %432 = vbcast.lane.b32.xlu0 %v398, %s431
    %v433 = vpop.permute.xlu0 %432
    %s435 = sor.u32 256, 72
    %436 = vbcast.lane.b32.xlu0 %v398, %s435
    %v437 = vpop.permute.xlu0 %436
    %s439 = sor.u32 256, 80
    %440 = vbcast.lane.b32.xlu0 %v398, %s439
    %v441 = vpop.permute.xlu0 %440
    %s443 = sor.u32 256, 88
    %444 = vbcast.lane.b32.xlu0 %v398, %s443
    %v445 = vpop.permute.xlu0 %444
    %s447 = sor.u32 256, 96
    %448 = vbcast.lane.b32.xlu0 %v398, %s447
    %v449 = vpop.permute.xlu0 %448
    %s451 = sor.u32 256, 104
    %452 = vbcast.lane.b32.xlu0 %v398, %s451
    %v453 = vpop.permute.xlu0 %452
    %s455 = sor.u32 256, 112
    %456 = vbcast.lane.b32.xlu0 %v398, %s455
    %v457 = vpop.permute.xlu0 %456
    %s459 = sor.u32 256, 120
    %460 = vbcast.lane.b32.xlu0 %v398, %s459
    %v461 = vpop.permute.xlu0 %460
    %v462 = vlaneseq
    %v463 = vshrl.u32 %v462, 7
    %v464 = vsub.s32 6, %v463
    %v465 = vrot.slane %v59, %v464
    %467 = vbcast.lane.b32.xlu0 %v465, 256
    %v468 = vpop.permute.xlu0 %467
    %s470 = sor.u32 256, 8
    %471 = vbcast.lane.b32.xlu0 %v465, %s470
    %v472 = vpop.permute.xlu0 %471
    %s474 = sor.u32 256, 16
    %475 = vbcast.lane.b32.xlu0 %v465, %s474
    %v476 = vpop.permute.xlu0 %475
    %s478 = sor.u32 256, 24
    %479 = vbcast.lane.b32.xlu0 %v465, %s478
    %v480 = vpop.permute.xlu0 %479
    %s482 = sor.u32 256, 32
    %483 = vbcast.lane.b32.xlu0 %v465, %s482
    %v484 = vpop.permute.xlu0 %483
    %s486 = sor.u32 256, 40
    %487 = vbcast.lane.b32.xlu0 %v465, %s486
    %v488 = vpop.permute.xlu0 %487
    %s490 = sor.u32 256, 48
    %491 = vbcast.lane.b32.xlu0 %v465, %s490
    %v492 = vpop.permute.xlu0 %491
    %s494 = sor.u32 256, 56
    %495 = vbcast.lane.b32.xlu0 %v465, %s494
    %v496 = vpop.permute.xlu0 %495
    %s498 = sor.u32 256, 64
    %499 = vbcast.lane.b32.xlu0 %v465, %s498
    %v500 = vpop.permute.xlu0 %499
    %s502 = sor.u32 256, 72
    %503 = vbcast.lane.b32.xlu0 %v465, %s502
    %v504 = vpop.permute.xlu0 %503
    %s506 = sor.u32 256, 80
    %507 = vbcast.lane.b32.xlu0 %v465, %s506
    %v508 = vpop.permute.xlu0 %507
    %s510 = sor.u32 256, 88
    %511 = vbcast.lane.b32.xlu0 %v465, %s510
    %v512 = vpop.permute.xlu0 %511
    %s514 = sor.u32 256, 96
    %515 = vbcast.lane.b32.xlu0 %v465, %s514
    %v516 = vpop.permute.xlu0 %515
    %s518 = sor.u32 256, 104
    %519 = vbcast.lane.b32.xlu0 %v465, %s518
    %v520 = vpop.permute.xlu0 %519
    %s522 = sor.u32 256, 112
    %523 = vbcast.lane.b32.xlu0 %v465, %s522
    %v524 = vpop.permute.xlu0 %523
    %s526 = sor.u32 256, 120
    %527 = vbcast.lane.b32.xlu0 %v465, %s526
    %v528 = vpop.permute.xlu0 %527
    %v529 = vlaneseq
    %v530 = vshrl.u32 %v529, 7
    %v531 = vsub.s32 7, %v530
    %v532 = vrot.slane %v59, %v531
    %534 = vbcast.lane.b32.xlu0 %v532, 256
    %v535 = vpop.permute.xlu0 %534
    %s537 = sor.u32 256, 8
    %538 = vbcast.lane.b32.xlu0 %v532, %s537
    %v539 = vpop.permute.xlu0 %538
    %s541 = sor.u32 256, 16
    %542 = vbcast.lane.b32.xlu0 %v532, %s541
    %v543 = vpop.permute.xlu0 %542
    %s545 = sor.u32 256, 24
    %546 = vbcast.lane.b32.xlu0 %v532, %s545
    %v547 = vpop.permute.xlu0 %546
    %s549 = sor.u32 256, 32
    %550 = vbcast.lane.b32.xlu0 %v532, %s549
    %v551 = vpop.permute.xlu0 %550
    %s553 = sor.u32 256, 40
    %554 = vbcast.lane.b32.xlu0 %v532, %s553
    %v555 = vpop.permute.xlu0 %554
    %s557 = sor.u32 256, 48
    %558 = vbcast.lane.b32.xlu0 %v532, %s557
    %v559 = vpop.permute.xlu0 %558
    %s561 = sor.u32 256, 56
    %562 = vbcast.lane.b32.xlu0 %v532, %s561
    %v563 = vpop.permute.xlu0 %562
    %s565 = sor.u32 256, 64
    %566 = vbcast.lane.b32.xlu0 %v532, %s565
    %v567 = vpop.permute.xlu0 %566
    %s569 = sor.u32 256, 72
    %570 = vbcast.lane.b32.xlu0 %v532, %s569
    %v571 = vpop.permute.xlu0 %570
    %s573 = sor.u32 256, 80
    %574 = vbcast.lane.b32.xlu0 %v532, %s573
    %v575 = vpop.permute.xlu0 %574
    %s577 = sor.u32 256, 88
    %578 = vbcast.lane.b32.xlu0 %v532, %s577
    %v579 = vpop.permute.xlu0 %578
    %s581 = sor.u32 256, 96
    %582 = vbcast.lane.b32.xlu0 %v532, %s581
    %v583 = vpop.permute.xlu0 %582
    %s585 = sor.u32 256, 104
    %586 = vbcast.lane.b32.xlu0 %v532, %s585
    %v587 = vpop.permute.xlu0 %586
    %s589 = sor.u32 256, 112
    %590 = vbcast.lane.b32.xlu0 %v532, %s589
    %v591 = vpop.permute.xlu0 %590
    %s593 = sor.u32 256, 120
    %594 = vbcast.lane.b32.xlu0 %v532, %s593
    %v595 = vpop.permute.xlu0 %594
    %v597 = vcombine.high %v57, %v57
    %v599 = vunpack.c.l.s4 1966171168
    %v600 = vunpack.c.0.s8 %v599
    %v601 = vlaneseq
    %v602 = vshrl.u32 %v601, 7
    %v603 = vsub.s32 %v600, %v602
    %v604 = vrot.slane %v57, %v603
    %v606 = vunpack.c.l.s4 1966171168
    %v607 = vunpack.c.0.s8 %v606
    %v608 = vlaneseq
    %v609 = vshrl.u32 %v608, 7
    %v610 = vsub.s32 %v607, %v609
    %v611 = vrot.slane %v597, %v610
    %v612 = vcombine.high %v604, %v604
    %v613 = vcombine.high %v611, %v611
    %v615 = vunpack.c.l.s4 1966171168
    %v616 = vunpack.c.0.s8 %v615
    %v617 = vlaneseq
    %v618 = vshrl.u32 %v617, 7
    %v619 = vsub.s32 %v616, %v618
    %v620 = vrot.slane %v604, %v619
    %v622 = vunpack.c.l.s4 1966171168
    %v623 = vunpack.c.0.s8 %v622
    %v624 = vlaneseq
    %v625 = vshrl.u32 %v624, 7
    %v626 = vsub.s32 %v623, %v625
    %v627 = vrot.slane %v611, %v626
    %v629 = vunpack.c.l.s4 1966171168
    %v630 = vunpack.c.0.s8 %v629
    %v631 = vlaneseq
    %v632 = vshrl.u32 %v631, 7
    %v633 = vsub.s32 %v630, %v632
    %v634 = vrot.slane %v612, %v633
    %v636 = vunpack.c.l.s4 1966171168
    %v637 = vunpack.c.0.s8 %v636
    %v638 = vlaneseq
    %v639 = vshrl.u32 %v638, 7
    %v640 = vsub.s32 %v637, %v639
    %v641 = vrot.slane %v613, %v640
    %v642 = vcombine.high %v620, %v620
    %v643 = vcombine.high %v627, %v627
    %v644 = vcombine.high %v634, %v634
    %v645 = vcombine.high %v641, %v641
    %v646 = vlaneseq
    %v647 = vshrl.u32 %v646, 7
    %v648 = vsub.s32 0, %v647
    %v649 = vrot.slane %v620, %v648
    %v650 = vlaneseq
    %v651 = vshrl.u32 %v650, 7
    %v652 = vsub.s32 0, %v651
    %v653 = vrot.slane %v634, %v652
    %v654 = vlaneseq
    %v655 = vshrl.u32 %v654, 7
    %v656 = vsub.s32 0, %v655
    %v657 = vrot.slane %v642, %v656
    %v658 = vlaneseq
    %v659 = vshrl.u32 %v658, 7
    %v660 = vsub.s32 0, %v659
    %v661 = vrot.slane %v644, %v660
    %v662 = vlaneseq
    %v663 = vshrl.u32 %v662, 7
    %v664 = vsub.s32 0, %v663
    %v665 = vrot.slane %v627, %v664
    %v666 = vlaneseq
    %v667 = vshrl.u32 %v666, 7
    %v668 = vsub.s32 0, %v667
    %v669 = vrot.slane %v641, %v668
    %v670 = vlaneseq
    %v671 = vshrl.u32 %v670, 7
    %v672 = vsub.s32 0, %v671
    %v673 = vrot.slane %v643, %v672
    %v674 = vlaneseq
    %v675 = vshrl.u32 %v674, 7
    %v676 = vsub.s32 0, %v675
    %v677 = vrot.slane %v645, %v676
    %v686 = vsub.f32 %v66, %v649
    %v687 = vsub.f32 %v70, %v649
    %v688 = vsub.f32 %v74, %v649
    %v689 = vsub.f32 %v78, %v649
    %v690 = vsub.f32 %v82, %v649
    %v691 = vsub.f32 %v86, %v649
    %v692 = vsub.f32 %v90, %v649
    %v693 = vsub.f32 %v94, %v649
    %v694 = vsub.f32 %v98, %v649
    %v695 = vsub.f32 %v102, %v649
    %v696 = vsub.f32 %v106, %v649
    %v697 = vsub.f32 %v110, %v649
    %v698 = vsub.f32 %v114, %v649
    %v699 = vsub.f32 %v118, %v649
    %v700 = vsub.f32 %v122, %v649
    %v701 = vsub.f32 %v126, %v649
    %v702 = vsub.f32 %v133, %v653
    %v703 = vsub.f32 %v137, %v653
    %v704 = vsub.f32 %v141, %v653
    %v705 = vsub.f32 %v145, %v653
    %v706 = vsub.f32 %v149, %v653
    %v707 = vsub.f32 %v153, %v653
    %v708 = vsub.f32 %v157, %v653
    %v709 = vsub.f32 %v161, %v653
    %v710 = vsub.f32 %v165, %v653
    %v711 = vsub.f32 %v169, %v653
    %v712 = vsub.f32 %v173, %v653
    %v713 = vsub.f32 %v177, %v653
    %v714 = vsub.f32 %v181, %v653
    %v715 = vsub.f32 %v185, %v653
    %v716 = vsub.f32 %v189, %v653
    %v717 = vsub.f32 %v193, %v653
    %v718 = vsub.f32 %v200, %v657
    %v719 = vsub.f32 %v204, %v657
    %v720 = vsub.f32 %v208, %v657
    %v721 = vsub.f32 %v212, %v657
    %v722 = vsub.f32 %v216, %v657
    %v723 = vsub.f32 %v220, %v657
    %v724 = vsub.f32 %v224, %v657
    %v725 = vsub.f32 %v228, %v657
    %v726 = vsub.f32 %v232, %v657
    %v727 = vsub.f32 %v236, %v657
    %v728 = vsub.f32 %v240, %v657
    %v729 = vsub.f32 %v244, %v657
    %v730 = vsub.f32 %v248, %v657
    %v731 = vsub.f32 %v252, %v657
    %v732 = vsub.f32 %v256, %v657
    %v733 = vsub.f32 %v260, %v657
    %v734 = vsub.f32 %v267, %v661
    %v735 = vsub.f32 %v271, %v661
    %v736 = vsub.f32 %v275, %v661
    %v737 = vsub.f32 %v279, %v661
    %v738 = vsub.f32 %v283, %v661
    %v739 = vsub.f32 %v287, %v661
    %v740 = vsub.f32 %v291, %v661
    %v741 = vsub.f32 %v295, %v661
    %v742 = vsub.f32 %v299, %v661
    %v743 = vsub.f32 %v303, %v661
    %v744 = vsub.f32 %v307, %v661
    %v745 = vsub.f32 %v311, %v661
    %v746 = vsub.f32 %v315, %v661
    %v747 = vsub.f32 %v319, %v661
    %v748 = vsub.f32 %v323, %v661
    %v749 = vsub.f32 %v327, %v661
    %v750 = vsub.f32 %v334, %v665
    %v751 = vsub.f32 %v338, %v665
    %v752 = vsub.f32 %v342, %v665
    %v753 = vsub.f32 %v346, %v665
    %v754 = vsub.f32 %v350, %v665
    %v755 = vsub.f32 %v354, %v665
    %v756 = vsub.f32 %v358, %v665
    %v757 = vsub.f32 %v362, %v665
    %v758 = vsub.f32 %v366, %v665
    %v759 = vsub.f32 %v370, %v665
    %v760 = vsub.f32 %v374, %v665
    %v761 = vsub.f32 %v378, %v665
    %v762 = vsub.f32 %v382, %v665
    %v763 = vsub.f32 %v386, %v665
    %v764 = vsub.f32 %v390, %v665
    %v765 = vsub.f32 %v394, %v665
    %v766 = vsub.f32 %v401, %v669
    %v767 = vsub.f32 %v405, %v669
    %v768 = vsub.f32 %v409, %v669
    %v769 = vsub.f32 %v413, %v669
    %v770 = vsub.f32 %v417, %v669
    %v771 = vsub.f32 %v421, %v669
    %v772 = vsub.f32 %v425, %v669
    %v773 = vsub.f32 %v429, %v669
    %v774 = vsub.f32 %v433, %v669
    %v775 = vsub.f32 %v437, %v669
    %v776 = vsub.f32 %v441, %v669
    %v777 = vsub.f32 %v445, %v669
    %v778 = vsub.f32 %v449, %v669
    %v779 = vsub.f32 %v453, %v669
    %v780 = vsub.f32 %v457, %v669
    %v781 = vsub.f32 %v461, %v669
    %v782 = vsub.f32 %v468, %v673
    %v783 = vsub.f32 %v472, %v673
    %v784 = vsub.f32 %v476, %v673
    %v785 = vsub.f32 %v480, %v673
    %v786 = vsub.f32 %v484, %v673
    %v787 = vsub.f32 %v488, %v673
    %v788 = vsub.f32 %v492, %v673
    %v789 = vsub.f32 %v496, %v673
    %v790 = vsub.f32 %v500, %v673
    %v791 = vsub.f32 %v504, %v673
    %v792 = vsub.f32 %v508, %v673
    %v793 = vsub.f32 %v512, %v673
    %v794 = vsub.f32 %v516, %v673
    %v795 = vsub.f32 %v520, %v673
    %v796 = vsub.f32 %v524, %v673
    %v797 = vsub.f32 %v528, %v673
    %v798 = vsub.f32 %v535, %v677
    %v799 = vsub.f32 %v539, %v677
    %v800 = vsub.f32 %v543, %v677
    %v801 = vsub.f32 %v547, %v677
    %v802 = vsub.f32 %v551, %v677
    %v803 = vsub.f32 %v555, %v677
    %v804 = vsub.f32 %v559, %v677
    %v805 = vsub.f32 %v563, %v677
    %v806 = vsub.f32 %v567, %v677
    %v807 = vsub.f32 %v571, %v677
    %v808 = vsub.f32 %v575, %v677
    %v809 = vsub.f32 %v579, %v677
    %v810 = vsub.f32 %v583, %v677
    %v811 = vsub.f32 %v587, %v677
    %v812 = vsub.f32 %v591, %v677
    %v813 = vsub.f32 %v595, %v677
    %v814 = vtanh.pop %v686
    %v815 = vtanh.pop %v687
    %v816 = vtanh.pop %v688
    %v817 = vtanh.pop %v689
    %v818 = vtanh.pop %v690
    %v819 = vtanh.pop %v691
    %v820 = vtanh.pop %v692
    %v821 = vtanh.pop %v693
    %v822 = vtanh.pop %v694
    %v823 = vtanh.pop %v695
    %v824 = vtanh.pop %v696
    %v825 = vtanh.pop %v697
    %v826 = vtanh.pop %v698
    %v827 = vtanh.pop %v699
    %v828 = vtanh.pop %v700
    %v829 = vtanh.pop %v701
    %v830 = vtanh.pop %v702
    %v831 = vtanh.pop %v703
    %v832 = vtanh.pop %v704
    %v833 = vtanh.pop %v705
    %v834 = vtanh.pop %v706
    %v835 = vtanh.pop %v707
    %v836 = vtanh.pop %v708
    %v837 = vtanh.pop %v709
    %v838 = vtanh.pop %v710
    %v839 = vtanh.pop %v711
    %v840 = vtanh.pop %v712
    %v841 = vtanh.pop %v713
    %v842 = vtanh.pop %v714
    %v843 = vtanh.pop %v715
    %v844 = vtanh.pop %v716
    %v845 = vtanh.pop %v717
    %v846 = vtanh.pop %v718
    %v847 = vtanh.pop %v719
    %v848 = vtanh.pop %v720
    %v849 = vtanh.pop %v721
    %v850 = vtanh.pop %v722
    %v851 = vtanh.pop %v723
    %v852 = vtanh.pop %v724
    %v853 = vtanh.pop %v725
    %v854 = vtanh.pop %v726
    %v855 = vtanh.pop %v727
    %v856 = vtanh.pop %v728
    %v857 = vtanh.pop %v729
    %v858 = vtanh.pop %v730
    %v859 = vtanh.pop %v731
    %v860 = vtanh.pop %v732
    %v861 = vtanh.pop %v733
    %v862 = vtanh.pop %v734
    %v863 = vtanh.pop %v735
    %v864 = vtanh.pop %v736
    %v865 = vtanh.pop %v737
    %v866 = vtanh.pop %v738
    %v867 = vtanh.pop %v739
    %v868 = vtanh.pop %v740
    %v869 = vtanh.pop %v741
    %v870 = vtanh.pop %v742
    %v871 = vtanh.pop %v743
    %v872 = vtanh.pop %v744
    %v873 = vtanh.pop %v745
    %v874 = vtanh.pop %v746
    %v875 = vtanh.pop %v747
    %v876 = vtanh.pop %v748
    %v877 = vtanh.pop %v749
    %v878 = vtanh.pop %v750
    %v879 = vtanh.pop %v751
    %v880 = vtanh.pop %v752
    %v881 = vtanh.pop %v753
    %v882 = vtanh.pop %v754
    %v883 = vtanh.pop %v755
    %v884 = vtanh.pop %v756
    %v885 = vtanh.pop %v757
    %v886 = vtanh.pop %v758
    %v887 = vtanh.pop %v759
    %v888 = vtanh.pop %v760
    %v889 = vtanh.pop %v761
    %v890 = vtanh.pop %v762
    %v891 = vtanh.pop %v763
    %v892 = vtanh.pop %v764
    %v893 = vtanh.pop %v765
    %v894 = vtanh.pop %v766
    %v895 = vtanh.pop %v767
    %v896 = vtanh.pop %v768
    %v897 = vtanh.pop %v769
    %v898 = vtanh.pop %v770
    %v899 = vtanh.pop %v771
    %v900 = vtanh.pop %v772
    %v901 = vtanh.pop %v773
    %v902 = vtanh.pop %v774
    %v903 = vtanh.pop %v775
    %v904 = vtanh.pop %v776
    %v905 = vtanh.pop %v777
    %v906 = vtanh.pop %v778
    %v907 = vtanh.pop %v779
    %v908 = vtanh.pop %v780
    %v909 = vtanh.pop %v781
    %v910 = vtanh.pop %v782
    %v911 = vtanh.pop %v783
    %v912 = vtanh.pop %v784
    %v913 = vtanh.pop %v785
    %v914 = vtanh.pop %v786
    %v915 = vtanh.pop %v787
    %v916 = vtanh.pop %v788
    %v917 = vtanh.pop %v789
    %v918 = vtanh.pop %v790
    %v919 = vtanh.pop %v791
    %v920 = vtanh.pop %v792
    %v921 = vtanh.pop %v793
    %v922 = vtanh.pop %v794
    %v923 = vtanh.pop %v795
    %v924 = vtanh.pop %v796
    %v925 = vtanh.pop %v797
    %v926 = vtanh.pop %v798
    %v927 = vtanh.pop %v799
    %v928 = vtanh.pop %v800
    %v929 = vtanh.pop %v801
    %v930 = vtanh.pop %v802
    %v931 = vtanh.pop %v803
    %v932 = vtanh.pop %v804
    %v933 = vtanh.pop %v805
    %v934 = vtanh.pop %v806
    %v935 = vtanh.pop %v807
    %v936 = vtanh.pop %v808
    %v937 = vtanh.pop %v809
    %v938 = vtanh.pop %v810
    %v939 = vtanh.pop %v811
    %v940 = vtanh.pop %v812
    %v941 = vtanh.pop %v813
    %s942 = smul.u32 %s54, 8
    %s943 = scalar_lea.vmem [#allocation2], %s942
    %v944 = vld [vmem:[%s943] sm:$0xff]
    %v945 = vadd.f32 %v814, %v815
    %v946 = vadd.f32 %v945, %v816
    %v947 = vadd.f32 %v946, %v817
    %v948 = vadd.f32 %v947, %v818
    %v949 = vadd.f32 %v948, %v819
    %v950 = vadd.f32 %v949, %v820
    %v951 = vadd.f32 %v950, %v821
    %v952 = vadd.f32 %v951, %v822
    %v953 = vadd.f32 %v952, %v823
    %v954 = vadd.f32 %v953, %v824
    %v955 = vadd.f32 %v954, %v825
    %v956 = vadd.f32 %v955, %v826
    %v957 = vadd.f32 %v956, %v827
    %v958 = vadd.f32 %v957, %v828
    %v959 = vadd.f32 %v958, %v829
    %v960 = vrot.slane %v959, 4
    %v961 = vadd.f32 %v959, %v960
    %v962 = vrot.slane %v961, 2
    %v963 = vadd.f32 %v961, %v962
    %v964 = vrot.slane %v963, 1
    %v965 = vadd.f32 %v963, %v964
    %v966 = vadd.f32 %v830, %v831
    %v967 = vadd.f32 %v966, %v832
    %v968 = vadd.f32 %v967, %v833
    %v969 = vadd.f32 %v968, %v834
    %v970 = vadd.f32 %v969, %v835
    %v971 = vadd.f32 %v970, %v836
    %v972 = vadd.f32 %v971, %v837
    %v973 = vadd.f32 %v972, %v838
    %v974 = vadd.f32 %v973, %v839
    %v975 = vadd.f32 %v974, %v840
    %v976 = vadd.f32 %v975, %v841
    %v977 = vadd.f32 %v976, %v842
    %v978 = vadd.f32 %v977, %v843
    %v979 = vadd.f32 %v978, %v844
    %v980 = vadd.f32 %v979, %v845
    %v981 = vrot.slane %v980, 4
    %v982 = vadd.f32 %v980, %v981
    %v983 = vrot.slane %v982, 2
    %v984 = vadd.f32 %v982, %v983
    %v985 = vrot.slane %v984, 1
    %v986 = vadd.f32 %v984, %v985
    %v987 = vadd.f32 %v846, %v847
    %v988 = vadd.f32 %v987, %v848
    %v989 = vadd.f32 %v988, %v849
    %v990 = vadd.f32 %v989, %v850
    %v991 = vadd.f32 %v990, %v851
    %v992 = vadd.f32 %v991, %v852
    %v993 = vadd.f32 %v992, %v853
    %v994 = vadd.f32 %v993, %v854
    %v995 = vadd.f32 %v994, %v855
    %v996 = vadd.f32 %v995, %v856
    %v997 = vadd.f32 %v996, %v857
    %v998 = vadd.f32 %v997, %v858
    %v999 = vadd.f32 %v998, %v859
    %v1000 = vadd.f32 %v999, %v860
    %v1001 = vadd.f32 %v1000, %v861
    %v1002 = vrot.slane %v1001, 4
    %v1003 = vadd.f32 %v1001, %v1002
    %v1004 = vrot.slane %v1003, 2
    %v1005 = vadd.f32 %v1003, %v1004
    %v1006 = vrot.slane %v1005, 1
    %v1007 = vadd.f32 %v1005, %v1006
    %v1008 = vadd.f32 %v862, %v863
    %v1009 = vadd.f32 %v1008, %v864
    %v1010 = vadd.f32 %v1009, %v865
    %v1011 = vadd.f32 %v1010, %v866
    %v1012 = vadd.f32 %v1011, %v867
    %v1013 = vadd.f32 %v1012, %v868
    %v1014 = vadd.f32 %v1013, %v869
    %v1015 = vadd.f32 %v1014, %v870
    %v1016 = vadd.f32 %v1015, %v871
    %v1017 = vadd.f32 %v1016, %v872
    %v1018 = vadd.f32 %v1017, %v873
    %v1019 = vadd.f32 %v1018, %v874
    %v1020 = vadd.f32 %v1019, %v875
    %v1021 = vadd.f32 %v1020, %v876
    %v1022 = vadd.f32 %v1021, %v877
    %v1023 = vrot.slane %v1022, 4
    %v1024 = vadd.f32 %v1022, %v1023
    %v1025 = vrot.slane %v1024, 2
    %v1026 = vadd.f32 %v1024, %v1025
    %v1027 = vrot.slane %v1026, 1
    %v1028 = vadd.f32 %v1026, %v1027
    %v1029 = vadd.f32 %v878, %v879
    %v1030 = vadd.f32 %v1029, %v880
    %v1031 = vadd.f32 %v1030, %v881
    %v1032 = vadd.f32 %v1031, %v882
    %v1033 = vadd.f32 %v1032, %v883
    %v1034 = vadd.f32 %v1033, %v884
    %v1035 = vadd.f32 %v1034, %v885
    %v1036 = vadd.f32 %v1035, %v886
    %v1037 = vadd.f32 %v1036, %v887
    %v1038 = vadd.f32 %v1037, %v888
    %v1039 = vadd.f32 %v1038, %v889
    %v1040 = vadd.f32 %v1039, %v890
    %v1041 = vadd.f32 %v1040, %v891
    %v1042 = vadd.f32 %v1041, %v892
    %v1043 = vadd.f32 %v1042, %v893
    %v1044 = vrot.slane %v1043, 4
    %v1045 = vadd.f32 %v1043, %v1044
    %v1046 = vrot.slane %v1045, 2
    %v1047 = vadd.f32 %v1045, %v1046
    %v1048 = vrot.slane %v1047, 1
    %v1049 = vadd.f32 %v1047, %v1048
    %v1050 = vadd.f32 %v894, %v895
    %v1051 = vadd.f32 %v1050, %v896
    %v1052 = vadd.f32 %v1051, %v897
    %v1053 = vadd.f32 %v1052, %v898
    %v1054 = vadd.f32 %v1053, %v899
    %v1055 = vadd.f32 %v1054, %v900
    %v1056 = vadd.f32 %v1055, %v901
    %v1057 = vadd.f32 %v1056, %v902
    %v1058 = vadd.f32 %v1057, %v903
    %v1059 = vadd.f32 %v1058, %v904
    %v1060 = vadd.f32 %v1059, %v905
    %v1061 = vadd.f32 %v1060, %v906
    %v1062 = vadd.f32 %v1061, %v907
    %v1063 = vadd.f32 %v1062, %v908
    %v1064 = vadd.f32 %v1063, %v909
    %v1065 = vrot.slane %v1064, 4
    %v1066 = vadd.f32 %v1064, %v1065
    %v1067 = vrot.slane %v1066, 2
    %v1068 = vadd.f32 %v1066, %v1067
    %v1069 = vrot.slane %v1068, 1
    %v1070 = vadd.f32 %v1068, %v1069
    %v1071 = vadd.f32 %v910, %v911
    %v1072 = vadd.f32 %v1071, %v912
    %v1073 = vadd.f32 %v1072, %v913
    %v1074 = vadd.f32 %v1073, %v914
    %v1075 = vadd.f32 %v1074, %v915
    %v1076 = vadd.f32 %v1075, %v916
    %v1077 = vadd.f32 %v1076, %v917
    %v1078 = vadd.f32 %v1077, %v918
    %v1079 = vadd.f32 %v1078, %v919
    %v1080 = vadd.f32 %v1079, %v920
    %v1081 = vadd.f32 %v1080, %v921
    %v1082 = vadd.f32 %v1081, %v922
    %v1083 = vadd.f32 %v1082, %v923
    %v1084 = vadd.f32 %v1083, %v924
    %v1085 = vadd.f32 %v1084, %v925
    %v1086 = vrot.slane %v1085, 4
    %v1087 = vadd.f32 %v1085, %v1086
    %v1088 = vrot.slane %v1087, 2
    %v1089 = vadd.f32 %v1087, %v1088
    %v1090 = vrot.slane %v1089, 1
    %v1091 = vadd.f32 %v1089, %v1090
    %v1092 = vadd.f32 %v926, %v927
    %v1093 = vadd.f32 %v1092, %v928
    %v1094 = vadd.f32 %v1093, %v929
    %v1095 = vadd.f32 %v1094, %v930
    %v1096 = vadd.f32 %v1095, %v931
    %v1097 = vadd.f32 %v1096, %v932
    %v1098 = vadd.f32 %v1097, %v933
    %v1099 = vadd.f32 %v1098, %v934
    %v1100 = vadd.f32 %v1099, %v935
    %v1101 = vadd.f32 %v1100, %v936
    %v1102 = vadd.f32 %v1101, %v937
    %v1103 = vadd.f32 %v1102, %v938
    %v1104 = vadd.f32 %v1103, %v939
    %v1105 = vadd.f32 %v1104, %v940
    %v1106 = vadd.f32 %v1105, %v941
    %v1107 = vrot.slane %v1106, 4
    %v1108 = vadd.f32 %v1106, %v1107
    %v1109 = vrot.slane %v1108, 2
    %v1110 = vadd.f32 %v1108, %v1109
    %v1111 = vrot.slane %v1110, 1
    %v1112 = vadd.f32 %v1110, %v1111
    %vm1121 = vcmask 1041409
    %v1122 = vsel %vm1121, %v986, %v965
    %vm1123 = vcmask 1042434
    %v1124 = vsel %vm1123, %v1007, %v1122
    %vm1125 = vcmask 1043459
    %v1126 = vsel %vm1125, %v1028, %v1124
    %vm1127 = vcmask 1044484
    %v1128 = vsel %vm1127, %v1049, %v1126
    %vm1129 = vcmask 1045509
    %v1130 = vsel %vm1129, %v1070, %v1128
    %vm1131 = vcmask 1046534
    %v1132 = vsel %vm1131, %v1091, %v1130
    %vm1133 = vcmask 1047559
    %v1134 = vsel %vm1133, %v1112, %v1132
    %v1136 = vadd.f32 %v944, %v1134
    %1137 = vst [vmem:[%s943] sm:$0xff] %v1136
    %p1138 = scmp.ne.s32.totalorder %s54, %s55
    // Predicated region
    $region18: #{tpu_custom_call.1} parent=1 // pred_check
      %p1139 = pneg %p1138
    $region19: #{tpu_custom_call.1} parent=1 // pred_check_branch
      %1141 = sbr.rel (%p1139) target = $region21
    $region20: #{tpu_custom_call.1} parent=1 // pred_region
      %s1142 = smul.u32 %s55, 8
      %s1143 = scalar_lea.vmem [#allocation2], %s1142
      %v1144 = vld [vmem:[%s1143] sm:$0xff]
      %1145 = vadd.xlane.f32.xlu0 %v814
      %v1146 = vpop.xlane.xlu0 %1145
      %1147 = vadd.xlane.f32.xlu0 %v815
      %v1148 = vpop.xlane.xlu0 %1147
      %1149 = vadd.xlane.f32.xlu0 %v816
      %v1150 = vpop.xlane.xlu0 %1149
      %1151 = vadd.xlane.f32.xlu0 %v817
      %v1152 = vpop.xlane.xlu0 %1151
      %1153 = vadd.xlane.f32.xlu0 %v818
      %v1154 = vpop.xlane.xlu0 %1153
      %1155 = vadd.xlane.f32.xlu0 %v819
      %v1156 = vpop.xlane.xlu0 %1155
      %1157 = vadd.xlane.f32.xlu0 %v820
      %v1158 = vpop.xlane.xlu0 %1157
      %1159 = vadd.xlane.f32.xlu0 %v821
      %v1160 = vpop.xlane.xlu0 %1159
      %1161 = vadd.xlane.f32.xlu0 %v822
      %v1162 = vpop.xlane.xlu0 %1161
      %1163 = vadd.xlane.f32.xlu0 %v823
      %v1164 = vpop.xlane.xlu0 %1163
      %1165 = vadd.xlane.f32.xlu0 %v824
      %v1166 = vpop.xlane.xlu0 %1165
      %1167 = vadd.xlane.f32.xlu0 %v825
      %v1168 = vpop.xlane.xlu0 %1167
      %1169 = vadd.xlane.f32.xlu0 %v826
      %v1170 = vpop.xlane.xlu0 %1169
      %1171 = vadd.xlane.f32.xlu0 %v827
      %v1172 = vpop.xlane.xlu0 %1171
      %1173 = vadd.xlane.f32.xlu0 %v828
      %v1174 = vpop.xlane.xlu0 %1173
      %1175 = vadd.xlane.f32.xlu0 %v829
      %v1176 = vpop.xlane.xlu0 %1175
      %1177 = vadd.xlane.f32.xlu0 %v830
      %v1178 = vpop.xlane.xlu0 %1177
      %1179 = vadd.xlane.f32.xlu0 %v831
      %v1180 = vpop.xlane.xlu0 %1179
      %1181 = vadd.xlane.f32.xlu0 %v832
      %v1182 = vpop.xlane.xlu0 %1181
      %1183 = vadd.xlane.f32.xlu0 %v833
      %v1184 = vpop.xlane.xlu0 %1183
      %1185 = vadd.xlane.f32.xlu0 %v834
      %v1186 = vpop.xlane.xlu0 %1185
      %1187 = vadd.xlane.f32.xlu0 %v835
      %v1188 = vpop.xlane.xlu0 %1187
      %1189 = vadd.xlane.f32.xlu0 %v836
      %v1190 = vpop.xlane.xlu0 %1189
      %1191 = vadd.xlane.f32.xlu0 %v837
      %v1192 = vpop.xlane.xlu0 %1191
      %1193 = vadd.xlane.f32.xlu0 %v838
      %v1194 = vpop.xlane.xlu0 %1193
      %1195 = vadd.xlane.f32.xlu0 %v839
      %v1196 = vpop.xlane.xlu0 %1195
      %1197 = vadd.xlane.f32.xlu0 %v840
      %v1198 = vpop.xlane.xlu0 %1197
      %1199 = vadd.xlane.f32.xlu0 %v841
      %v1200 = vpop.xlane.xlu0 %1199
      %1201 = vadd.xlane.f32.xlu0 %v842
      %v1202 = vpop.xlane.xlu0 %1201
      %1203 = vadd.xlane.f32.xlu0 %v843
      %v1204 = vpop.xlane.xlu0 %1203
      %1205 = vadd.xlane.f32.xlu0 %v844
      %v1206 = vpop.xlane.xlu0 %1205
      %1207 = vadd.xlane.f32.xlu0 %v845
      %v1208 = vpop.xlane.xlu0 %1207
      %1209 = vadd.xlane.f32.xlu0 %v846
      %v1210 = vpop.xlane.xlu0 %1209
      %1211 = vadd.xlane.f32.xlu0 %v847
      %v1212 = vpop.xlane.xlu0 %1211
      %1213 = vadd.xlane.f32.xlu0 %v848
      %v1214 = vpop.xlane.xlu0 %1213
      %1215 = vadd.xlane.f32.xlu0 %v849
      %v1216 = vpop.xlane.xlu0 %1215
      %1217 = vadd.xlane.f32.xlu0 %v850
      %v1218 = vpop.xlane.xlu0 %1217
      %1219 = vadd.xlane.f32.xlu0 %v851
      %v1220 = vpop.xlane.xlu0 %1219
      %1221 = vadd.xlane.f32.xlu0 %v852
      %v1222 = vpop.xlane.xlu0 %1221
      %1223 = vadd.xlane.f32.xlu0 %v853
      %v1224 = vpop.xlane.xlu0 %1223
      %1225 = vadd.xlane.f32.xlu0 %v854
      %v1226 = vpop.xlane.xlu0 %1225
      %1227 = vadd.xlane.f32.xlu0 %v855
      %v1228 = vpop.xlane.xlu0 %1227
      %1229 = vadd.xlane.f32.xlu0 %v856
      %v1230 = vpop.xlane.xlu0 %1229
      %1231 = vadd.xlane.f32.xlu0 %v857
      %v1232 = vpop.xlane.xlu0 %1231
      %1233 = vadd.xlane.f32.xlu0 %v858
      %v1234 = vpop.xlane.xlu0 %1233
      %1235 = vadd.xlane.f32.xlu0 %v859
      %v1236 = vpop.xlane.xlu0 %1235
      %1237 = vadd.xlane.f32.xlu0 %v860
      %v1238 = vpop.xlane.xlu0 %1237
      %1239 = vadd.xlane.f32.xlu0 %v861
      %v1240 = vpop.xlane.xlu0 %1239
      %1241 = vadd.xlane.f32.xlu0 %v862
      %v1242 = vpop.xlane.xlu0 %1241
      %1243 = vadd.xlane.f32.xlu0 %v863
      %v1244 = vpop.xlane.xlu0 %1243
      %1245 = vadd.xlane.f32.xlu0 %v864
      %v1246 = vpop.xlane.xlu0 %1245
      %1247 = vadd.xlane.f32.xlu0 %v865
      %v1248 = vpop.xlane.xlu0 %1247
      %1249 = vadd.xlane.f32.xlu0 %v866
      %v1250 = vpop.xlane.xlu0 %1249
      %1251 = vadd.xlane.f32.xlu0 %v867
      %v1252 = vpop.xlane.xlu0 %1251
      %1253 = vadd.xlane.f32.xlu0 %v868
      %v1254 = vpop.xlane.xlu0 %1253
      %1255 = vadd.xlane.f32.xlu0 %v869
      %v1256 = vpop.xlane.xlu0 %1255
      %1257 = vadd.xlane.f32.xlu0 %v870
      %v1258 = vpop.xlane.xlu0 %1257
      %1259 = vadd.xlane.f32.xlu0 %v871
      %v1260 = vpop.xlane.xlu0 %1259
      %1261 = vadd.xlane.f32.xlu0 %v872
      %v1262 = vpop.xlane.xlu0 %1261
      %1263 = vadd.xlane.f32.xlu0 %v873
      %v1264 = vpop.xlane.xlu0 %1263
      %1265 = vadd.xlane.f32.xlu0 %v874
      %v1266 = vpop.xlane.xlu0 %1265
      %1267 = vadd.xlane.f32.xlu0 %v875
      %v1268 = vpop.xlane.xlu0 %1267
      %1269 = vadd.xlane.f32.xlu0 %v876
      %v1270 = vpop.xlane.xlu0 %1269
      %1271 = vadd.xlane.f32.xlu0 %v877
      %v1272 = vpop.xlane.xlu0 %1271
      %1273 = vadd.xlane.f32.xlu0 %v878
      %v1274 = vpop.xlane.xlu0 %1273
      %1275 = vadd.xlane.f32.xlu0 %v879
      %v1276 = vpop.xlane.xlu0 %1275
      %1277 = vadd.xlane.f32.xlu0 %v880
      %v1278 = vpop.xlane.xlu0 %1277
      %1279 = vadd.xlane.f32.xlu0 %v881
      %v1280 = vpop.xlane.xlu0 %1279
      %1281 = vadd.xlane.f32.xlu0 %v882
      %v1282 = vpop.xlane.xlu0 %1281
      %1283 = vadd.xlane.f32.xlu0 %v883
      %v1284 = vpop.xlane.xlu0 %1283
      %1285 = vadd.xlane.f32.xlu0 %v884
      %v1286 = vpop.xlane.xlu0 %1285
      %1287 = vadd.xlane.f32.xlu0 %v885
      %v1288 = vpop.xlane.xlu0 %1287
      %1289 = vadd.xlane.f32.xlu0 %v886
      %v1290 = vpop.xlane.xlu0 %1289
      %1291 = vadd.xlane.f32.xlu0 %v887
      %v1292 = vpop.xlane.xlu0 %1291
      %1293 = vadd.xlane.f32.xlu0 %v888
      %v1294 = vpop.xlane.xlu0 %1293
      %1295 = vadd.xlane.f32.xlu0 %v889
      %v1296 = vpop.xlane.xlu0 %1295
      %1297 = vadd.xlane.f32.xlu0 %v890
      %v1298 = vpop.xlane.xlu0 %1297
      %1299 = vadd.xlane.f32.xlu0 %v891
      %v1300 = vpop.xlane.xlu0 %1299
      %1301 = vadd.xlane.f32.xlu0 %v892
      %v1302 = vpop.xlane.xlu0 %1301
      %1303 = vadd.xlane.f32.xlu0 %v893
      %v1304 = vpop.xlane.xlu0 %1303
      %1305 = vadd.xlane.f32.xlu0 %v894
      %v1306 = vpop.xlane.xlu0 %1305
      %1307 = vadd.xlane.f32.xlu0 %v895
      %v1308 = vpop.xlane.xlu0 %1307
      %1309 = vadd.xlane.f32.xlu0 %v896
      %v1310 = vpop.xlane.xlu0 %1309
      %1311 = vadd.xlane.f32.xlu0 %v897
      %v1312 = vpop.xlane.xlu0 %1311
      %1313 = vadd.xlane.f32.xlu0 %v898
      %v1314 = vpop.xlane.xlu0 %1313
      %1315 = vadd.xlane.f32.xlu0 %v899
      %v1316 = vpop.xlane.xlu0 %1315
      %1317 = vadd.xlane.f32.xlu0 %v900
      %v1318 = vpop.xlane.xlu0 %1317
      %1319 = vadd.xlane.f32.xlu0 %v901
      %v1320 = vpop.xlane.xlu0 %1319
      %1321 = vadd.xlane.f32.xlu0 %v902
      %v1322 = vpop.xlane.xlu0 %1321
      %1323 = vadd.xlane.f32.xlu0 %v903
      %v1324 = vpop.xlane.xlu0 %1323
      %1325 = vadd.xlane.f32.xlu0 %v904
      %v1326 = vpop.xlane.xlu0 %1325
      %1327 = vadd.xlane.f32.xlu0 %v905
      %v1328 = vpop.xlane.xlu0 %1327
      %1329 = vadd.xlane.f32.xlu0 %v906
      %v1330 = vpop.xlane.xlu0 %1329
      %1331 = vadd.xlane.f32.xlu0 %v907
      %v1332 = vpop.xlane.xlu0 %1331
      %1333 = vadd.xlane.f32.xlu0 %v908
      %v1334 = vpop.xlane.xlu0 %1333
      %1335 = vadd.xlane.f32.xlu0 %v909
      %v1336 = vpop.xlane.xlu0 %1335
      %1337 = vadd.xlane.f32.xlu0 %v910
      %v1338 = vpop.xlane.xlu0 %1337
      %1339 = vadd.xlane.f32.xlu0 %v911
      %v1340 = vpop.xlane.xlu0 %1339
      %1341 = vadd.xlane.f32.xlu0 %v912
      %v1342 = vpop.xlane.xlu0 %1341
      %1343 = vadd.xlane.f32.xlu0 %v913
      %v1344 = vpop.xlane.xlu0 %1343
      %1345 = vadd.xlane.f32.xlu0 %v914
      %v1346 = vpop.xlane.xlu0 %1345
      %1347 = vadd.xlane.f32.xlu0 %v915
      %v1348 = vpop.xlane.xlu0 %1347
      %1349 = vadd.xlane.f32.xlu0 %v916
      %v1350 = vpop.xlane.xlu0 %1349
      %1351 = vadd.xlane.f32.xlu0 %v917
      %v1352 = vpop.xlane.xlu0 %1351
      %1353 = vadd.xlane.f32.xlu0 %v918
      %v1354 = vpop.xlane.xlu0 %1353
      %1355 = vadd.xlane.f32.xlu0 %v919
      %v1356 = vpop.xlane.xlu0 %1355
      %1357 = vadd.xlane.f32.xlu0 %v920
      %v1358 = vpop.xlane.xlu0 %1357
      %1359 = vadd.xlane.f32.xlu0 %v921
      %v1360 = vpop.xlane.xlu0 %1359
      %1361 = vadd.xlane.f32.xlu0 %v922
      %v1362 = vpop.xlane.xlu0 %1361
      %1363 = vadd.xlane.f32.xlu0 %v923
      %v1364 = vpop.xlane.xlu0 %1363
      %1365 = vadd.xlane.f32.xlu0 %v924
      %v1366 = vpop.xlane.xlu0 %1365
      %1367 = vadd.xlane.f32.xlu0 %v925
      %v1368 = vpop.xlane.xlu0 %1367
      %1369 = vadd.xlane.f32.xlu0 %v926
      %v1370 = vpop.xlane.xlu0 %1369
      %1371 = vadd.xlane.f32.xlu0 %v927
      %v1372 = vpop.xlane.xlu0 %1371
      %1373 = vadd.xlane.f32.xlu0 %v928
      %v1374 = vpop.xlane.xlu0 %1373
      %1375 = vadd.xlane.f32.xlu0 %v929
      %v1376 = vpop.xlane.xlu0 %1375
      %1377 = vadd.xlane.f32.xlu0 %v930
      %v1378 = vpop.xlane.xlu0 %1377
      %1379 = vadd.xlane.f32.xlu0 %v931
      %v1380 = vpop.xlane.xlu0 %1379
      %1381 = vadd.xlane.f32.xlu0 %v932
      %v1382 = vpop.xlane.xlu0 %1381
      %1383 = vadd.xlane.f32.xlu0 %v933
      %v1384 = vpop.xlane.xlu0 %1383
      %1385 = vadd.xlane.f32.xlu0 %v934
      %v1386 = vpop.xlane.xlu0 %1385
      %1387 = vadd.xlane.f32.xlu0 %v935
      %v1388 = vpop.xlane.xlu0 %1387
      %1389 = vadd.xlane.f32.xlu0 %v936
      %v1390 = vpop.xlane.xlu0 %1389
      %1391 = vadd.xlane.f32.xlu0 %v937
      %v1392 = vpop.xlane.xlu0 %1391
      %1393 = vadd.xlane.f32.xlu0 %v938
      %v1394 = vpop.xlane.xlu0 %1393
      %1395 = vadd.xlane.f32.xlu0 %v939
      %v1396 = vpop.xlane.xlu0 %1395
      %1397 = vadd.xlane.f32.xlu0 %v940
      %v1398 = vpop.xlane.xlu0 %1397
      %1399 = vadd.xlane.f32.xlu0 %v941
      %v1400 = vpop.xlane.xlu0 %1399
      %v1401 = vsub.f32 0.0, %v1146
      %v1402 = vsub.f32 0.0, %v1148
      %v1403 = vsub.f32 0.0, %v1150
      %v1404 = vsub.f32 0.0, %v1152
      %v1405 = vsub.f32 0.0, %v1154
      %v1406 = vsub.f32 0.0, %v1156
      %v1407 = vsub.f32 0.0, %v1158
      %v1408 = vsub.f32 0.0, %v1160
      %v1409 = vsub.f32 0.0, %v1162
      %v1410 = vsub.f32 0.0, %v1164
      %v1411 = vsub.f32 0.0, %v1166
      %v1412 = vsub.f32 0.0, %v1168
      %v1413 = vsub.f32 0.0, %v1170
      %v1414 = vsub.f32 0.0, %v1172
      %v1415 = vsub.f32 0.0, %v1174
      %v1416 = vsub.f32 0.0, %v1176
      %v1417 = vsub.f32 0.0, %v1178
      %v1418 = vsub.f32 0.0, %v1180
      %v1419 = vsub.f32 0.0, %v1182
      %v1420 = vsub.f32 0.0, %v1184
      %v1421 = vsub.f32 0.0, %v1186
      %v1422 = vsub.f32 0.0, %v1188
      %v1423 = vsub.f32 0.0, %v1190
      %v1424 = vsub.f32 0.0, %v1192
      %v1425 = vsub.f32 0.0, %v1194
      %v1426 = vsub.f32 0.0, %v1196
      %v1427 = vsub.f32 0.0, %v1198
      %v1428 = vsub.f32 0.0, %v1200
      %v1429 = vsub.f32 0.0, %v1202
      %v1430 = vsub.f32 0.0, %v1204
      %v1431 = vsub.f32 0.0, %v1206
      %v1432 = vsub.f32 0.0, %v1208
      %v1433 = vsub.f32 0.0, %v1210
      %v1434 = vsub.f32 0.0, %v1212
      %v1435 = vsub.f32 0.0, %v1214
      %v1436 = vsub.f32 0.0, %v1216
      %v1437 = vsub.f32 0.0, %v1218
      %v1438 = vsub.f32 0.0, %v1220
      %v1439 = vsub.f32 0.0, %v1222
      %v1440 = vsub.f32 0.0, %v1224
      %v1441 = vsub.f32 0.0, %v1226
      %v1442 = vsub.f32 0.0, %v1228
      %v1443 = vsub.f32 0.0, %v1230
      %v1444 = vsub.f32 0.0, %v1232
      %v1445 = vsub.f32 0.0, %v1234
      %v1446 = vsub.f32 0.0, %v1236
      %v1447 = vsub.f32 0.0, %v1238
      %v1448 = vsub.f32 0.0, %v1240
      %v1449 = vsub.f32 0.0, %v1242
      %v1450 = vsub.f32 0.0, %v1244
      %v1451 = vsub.f32 0.0, %v1246
      %v1452 = vsub.f32 0.0, %v1248
      %v1453 = vsub.f32 0.0, %v1250
      %v1454 = vsub.f32 0.0, %v1252
      %v1455 = vsub.f32 0.0, %v1254
      %v1456 = vsub.f32 0.0, %v1256
      %v1457 = vsub.f32 0.0, %v1258
      %v1458 = vsub.f32 0.0, %v1260
      %v1459 = vsub.f32 0.0, %v1262
      %v1460 = vsub.f32 0.0, %v1264
      %v1461 = vsub.f32 0.0, %v1266
      %v1462 = vsub.f32 0.0, %v1268
      %v1463 = vsub.f32 0.0, %v1270
      %v1464 = vsub.f32 0.0, %v1272
      %v1465 = vsub.f32 0.0, %v1274
      %v1466 = vsub.f32 0.0, %v1276
      %v1467 = vsub.f32 0.0, %v1278
      %v1468 = vsub.f32 0.0, %v1280
      %v1469 = vsub.f32 0.0, %v1282
      %v1470 = vsub.f32 0.0, %v1284
      %v1471 = vsub.f32 0.0, %v1286
      %v1472 = vsub.f32 0.0, %v1288
      %v1473 = vsub.f32 0.0, %v1290
      %v1474 = vsub.f32 0.0, %v1292
      %v1475 = vsub.f32 0.0, %v1294
      %v1476 = vsub.f32 0.0, %v1296
      %v1477 = vsub.f32 0.0, %v1298
      %v1478 = vsub.f32 0.0, %v1300
      %v1479 = vsub.f32 0.0, %v1302
      %v1480 = vsub.f32 0.0, %v1304
      %v1481 = vsub.f32 0.0, %v1306
      %v1482 = vsub.f32 0.0, %v1308
      %v1483 = vsub.f32 0.0, %v1310
      %v1484 = vsub.f32 0.0, %v1312
      %v1485 = vsub.f32 0.0, %v1314
      %v1486 = vsub.f32 0.0, %v1316
      %v1487 = vsub.f32 0.0, %v1318
      %v1488 = vsub.f32 0.0, %v1320
      %v1489 = vsub.f32 0.0, %v1322
      %v1490 = vsub.f32 0.0, %v1324
      %v1491 = vsub.f32 0.0, %v1326
      %v1492 = vsub.f32 0.0, %v1328
      %v1493 = vsub.f32 0.0, %v1330
      %v1494 = vsub.f32 0.0, %v1332
      %v1495 = vsub.f32 0.0, %v1334
      %v1496 = vsub.f32 0.0, %v1336
      %v1497 = vsub.f32 0.0, %v1338
      %v1498 = vsub.f32 0.0, %v1340
      %v1499 = vsub.f32 0.0, %v1342
      %v1500 = vsub.f32 0.0, %v1344
      %v1501 = vsub.f32 0.0, %v1346
      %v1502 = vsub.f32 0.0, %v1348
      %v1503 = vsub.f32 0.0, %v1350
      %v1504 = vsub.f32 0.0, %v1352
      %v1505 = vsub.f32 0.0, %v1354
      %v1506 = vsub.f32 0.0, %v1356
      %v1507 = vsub.f32 0.0, %v1358
      %v1508 = vsub.f32 0.0, %v1360
      %v1509 = vsub.f32 0.0, %v1362
      %v1510 = vsub.f32 0.0, %v1364
      %v1511 = vsub.f32 0.0, %v1366
      %v1512 = vsub.f32 0.0, %v1368
      %v1513 = vsub.f32 0.0, %v1370
      %v1514 = vsub.f32 0.0, %v1372
      %v1515 = vsub.f32 0.0, %v1374
      %v1516 = vsub.f32 0.0, %v1376
      %v1517 = vsub.f32 0.0, %v1378
      %v1518 = vsub.f32 0.0, %v1380
      %v1519 = vsub.f32 0.0, %v1382
      %v1520 = vsub.f32 0.0, %v1384
      %v1521 = vsub.f32 0.0, %v1386
      %v1522 = vsub.f32 0.0, %v1388
      %v1523 = vsub.f32 0.0, %v1390
      %v1524 = vsub.f32 0.0, %v1392
      %v1525 = vsub.f32 0.0, %v1394
      %v1526 = vsub.f32 0.0, %v1396
      %v1527 = vsub.f32 0.0, %v1398
      %v1528 = vsub.f32 0.0, %v1400
      %v1657 = vlaneseq
      %v1658 = vand.u32 %v1657, 127
      %v1659 = vlaneseq
      %v1660 = vshrl.u32 %v1659, 7
      %v1661 = vsub.s32 %v1658, %v1660
      %v1662 = vrot.slane %v1401, %v1661
      %v1663 = vadd.s32 %v1658, 4294967288
      %v1664 = vlaneseq
      %v1665 = vshrl.u32 %v1664, 7
      %v1666 = vsub.s32 %v1663, %v1665
      %v1667 = vrot.slane %v1402, %v1666
      %vm1668 = vcmask 130112
      %v1669 = vsel %vm1668, %v1667, %v1662
      %v1670 = vadd.s32 %v1658, 4294967280
      %v1671 = vlaneseq
      %v1672 = vshrl.u32 %v1671, 7
      %v1673 = vsub.s32 %v1670, %v1672
      %v1674 = vrot.slane %v1403, %v1673
      %vm1675 = vcmask 195712
      %v1676 = vsel %vm1675, %v1674, %v1669
      %v1677 = vadd.s32 %v1658, 4294967272
      %v1678 = vlaneseq
      %v1679 = vshrl.u32 %v1678, 7
      %v1680 = vsub.s32 %v1677, %v1679
      %v1681 = vrot.slane %v1404, %v1680
      %vm1682 = vcmask 261312
      %v1683 = vsel %vm1682, %v1681, %v1676
      %v1684 = vadd.s32 %v1658, 4294967264
      %v1685 = vlaneseq
      %v1686 = vshrl.u32 %v1685, 7
      %v1687 = vsub.s32 %v1684, %v1686
      %v1688 = vrot.slane %v1405, %v1687
      %vm1689 = vcmask 326912
      %v1690 = vsel %vm1689, %v1688, %v1683
      %v1691 = vadd.s32 %v1658, 4294967256
      %v1692 = vlaneseq
      %v1693 = vshrl.u32 %v1692, 7
      %v1694 = vsub.s32 %v1691, %v1693
      %v1695 = vrot.slane %v1406, %v1694
      %vm1696 = vcmask 392512
      %v1697 = vsel %vm1696, %v1695, %v1690
      %v1698 = vadd.s32 %v1658, 4294967248
      %v1699 = vlaneseq
      %v1700 = vshrl.u32 %v1699, 7
      %v1701 = vsub.s32 %v1698, %v1700
      %v1702 = vrot.slane %v1407, %v1701
      %vm1703 = vcmask 458112
      %v1704 = vsel %vm1703, %v1702, %v1697
      %v1705 = vadd.s32 %v1658, 4294967240
      %v1706 = vlaneseq
      %v1707 = vshrl.u32 %v1706, 7
      %v1708 = vsub.s32 %v1705, %v1707
      %v1709 = vrot.slane %v1408, %v1708
      %vm1710 = vcmask 523712
      %v1711 = vsel %vm1710, %v1709, %v1704
      %v1712 = vadd.s32 %v1658, 4294967232
      %v1713 = vlaneseq
      %v1714 = vshrl.u32 %v1713, 7
      %v1715 = vsub.s32 %v1712, %v1714
      %v1716 = vrot.slane %v1409, %v1715
      %vm1717 = vcmask 589312
      %v1718 = vsel %vm1717, %v1716, %v1711
      %v1719 = vadd.s32 %v1658, 4294967224
      %v1720 = vlaneseq
      %v1721 = vshrl.u32 %v1720, 7
      %v1722 = vsub.s32 %v1719, %v1721
      %v1723 = vrot.slane %v1410, %v1722
      %vm1724 = vcmask 654912
      %v1725 = vsel %vm1724, %v1723, %v1718
      %v1726 = vadd.s32 %v1658, 4294967216
      %v1727 = vlaneseq
      %v1728 = vshrl.u32 %v1727, 7
      %v1729 = vsub.s32 %v1726, %v1728
      %v1730 = vrot.slane %v1411, %v1729
      %vm1731 = vcmask 720512
      %v1732 = vsel %vm1731, %v1730, %v1725
      %v1733 = vadd.s32 %v1658, 4294967208
      %v1734 = vlaneseq
      %v1735 = vshrl.u32 %v1734, 7
      %v1736 = vsub.s32 %v1733, %v1735
      %v1737 = vrot.slane %v1412, %v1736
      %vm1738 = vcmask 786112
      %v1739 = vsel %vm1738, %v1737, %v1732
      %v1740 = vadd.s32 %v1658, 4294967200
      %v1741 = vlaneseq
      %v1742 = vshrl.u32 %v1741, 7
      %v1743 = vsub.s32 %v1740, %v1742
      %v1744 = vrot.slane %v1413, %v1743
      %vm1745 = vcmask 851712
      %v1746 = vsel %vm1745, %v1744, %v1739
      %v1747 = vadd.s32 %v1658, 4294967192
      %v1748 = vlaneseq
      %v1749 = vshrl.u32 %v1748, 7
      %v1750 = vsub.s32 %v1747, %v1749
      %v1751 = vrot.slane %v1414, %v1750
      %vm1752 = vcmask 917312
      %v1753 = vsel %vm1752, %v1751, %v1746
      %v1754 = vadd.s32 %v1658, 4294967184
      %v1755 = vlaneseq
      %v1756 = vshrl.u32 %v1755, 7
      %v1757 = vsub.s32 %v1754, %v1756
      %v1758 = vrot.slane %v1415, %v1757
      %vm1759 = vcmask 982912
      %v1760 = vsel %vm1759, %v1758, %v1753
      %v1761 = vadd.s32 %v1658, 4294967176
      %v1762 = vlaneseq
      %v1763 = vshrl.u32 %v1762, 7
      %v1764 = vsub.s32 %v1761, %v1763
      %v1765 = vrot.slane %v1416, %v1764
      %vm1766 = vcmask 1048512
      %v1767 = vsel %vm1766, %v1765, %v1760
      %v1768 = vlaneseq
      %v1769 = vshrl.u32 %v1768, 7
      %v1770 = vsub.s32 %v1658, %v1769
      %v1771 = vrot.slane %v1417, %v1770
      %v1772 = vlaneseq
      %v1773 = vshrl.u32 %v1772, 7
      %v1774 = vsub.s32 %v1663, %v1773
      %v1775 = vrot.slane %v1418, %v1774
      %v1776 = vsel %vm1668, %v1775, %v1771
      %v1777 = vlaneseq
      %v1778 = vshrl.u32 %v1777, 7
      %v1779 = vsub.s32 %v1670, %v1778
      %v1780 = vrot.slane %v1419, %v1779
      %v1781 = vsel %vm1675, %v1780, %v1776
      %v1782 = vlaneseq
      %v1783 = vshrl.u32 %v1782, 7
      %v1784 = vsub.s32 %v1677, %v1783
      %v1785 = vrot.slane %v1420, %v1784
      %v1786 = vsel %vm1682, %v1785, %v1781
      %v1787 = vlaneseq
      %v1788 = vshrl.u32 %v1787, 7
      %v1789 = vsub.s32 %v1684, %v1788
      %v1790 = vrot.slane %v1421, %v1789
      %v1791 = vsel %vm1689, %v1790, %v1786
      %v1792 = vlaneseq
      %v1793 = vshrl.u32 %v1792, 7
      %v1794 = vsub.s32 %v1691, %v1793
      %v1795 = vrot.slane %v1422, %v1794
      %v1796 = vsel %vm1696, %v1795, %v1791
      %v1797 = vlaneseq
      %v1798 = vshrl.u32 %v1797, 7
      %v1799 = vsub.s32 %v1698, %v1798
      %v1800 = vrot.slane %v1423, %v1799
      %v1801 = vsel %vm1703, %v1800, %v1796
      %v1802 = vlaneseq
      %v1803 = vshrl.u32 %v1802, 7
      %v1804 = vsub.s32 %v1705, %v1803
      %v1805 = vrot.slane %v1424, %v1804
      %v1806 = vsel %vm1710, %v1805, %v1801
      %v1807 = vlaneseq
      %v1808 = vshrl.u32 %v1807, 7
      %v1809 = vsub.s32 %v1712, %v1808
      %v1810 = vrot.slane %v1425, %v1809
      %v1811 = vsel %vm1717, %v1810, %v1806
      %v1812 = vlaneseq
      %v1813 = vshrl.u32 %v1812, 7
      %v1814 = vsub.s32 %v1719, %v1813
      %v1815 = vrot.slane %v1426, %v1814
      %v1816 = vsel %vm1724, %v1815, %v1811
      %v1817 = vlaneseq
      %v1818 = vshrl.u32 %v1817, 7
      %v1819 = vsub.s32 %v1726, %v1818
      %v1820 = vrot.slane %v1427, %v1819
      %v1821 = vsel %vm1731, %v1820, %v1816
      %v1822 = vlaneseq
      %v1823 = vshrl.u32 %v1822, 7
      %v1824 = vsub.s32 %v1733, %v1823
      %v1825 = vrot.slane %v1428, %v1824
      %v1826 = vsel %vm1738, %v1825, %v1821
      %v1827 = vlaneseq
      %v1828 = vshrl.u32 %v1827, 7
      %v1829 = vsub.s32 %v1740, %v1828
      %v1830 = vrot.slane %v1429, %v1829
      %v1831 = vsel %vm1745, %v1830, %v1826
      %v1832 = vlaneseq
      %v1833 = vshrl.u32 %v1832, 7
      %v1834 = vsub.s32 %v1747, %v1833
      %v1835 = vrot.slane %v1430, %v1834
      %v1836 = vsel %vm1752, %v1835, %v1831
      %v1837 = vlaneseq
      %v1838 = vshrl.u32 %v1837, 7
      %v1839 = vsub.s32 %v1754, %v1838
      %v1840 = vrot.slane %v1431, %v1839
      %v1841 = vsel %vm1759, %v1840, %v1836
      %v1842 = vlaneseq
      %v1843 = vshrl.u32 %v1842, 7
      %v1844 = vsub.s32 %v1761, %v1843
      %v1845 = vrot.slane %v1432, %v1844
      %v1846 = vsel %vm1766, %v1845, %v1841
      %v1847 = vlaneseq
      %v1848 = vshrl.u32 %v1847, 7
      %v1849 = vsub.s32 %v1658, %v1848
      %v1850 = vrot.slane %v1433, %v1849
      %v1851 = vlaneseq
      %v1852 = vshrl.u32 %v1851, 7
      %v1853 = vsub.s32 %v1663, %v1852
      %v1854 = vrot.slane %v1434, %v1853
      %v1855 = vsel %vm1668, %v1854, %v1850
      %v1856 = vlaneseq
      %v1857 = vshrl.u32 %v1856, 7
      %v1858 = vsub.s32 %v1670, %v1857
      %v1859 = vrot.slane %v1435, %v1858
      %v1860 = vsel %vm1675, %v1859, %v1855
      %v1861 = vlaneseq
      %v1862 = vshrl.u32 %v1861, 7
      %v1863 = vsub.s32 %v1677, %v1862
      %v1864 = vrot.slane %v1436, %v1863
      %v1865 = vsel %vm1682, %v1864, %v1860
      %v1866 = vlaneseq
      %v1867 = vshrl.u32 %v1866, 7
      %v1868 = vsub.s32 %v1684, %v1867
      %v1869 = vrot.slane %v1437, %v1868
      %v1870 = vsel %vm1689, %v1869, %v1865
      %v1871 = vlaneseq
      %v1872 = vshrl.u32 %v1871, 7
      %v1873 = vsub.s32 %v1691, %v1872
      %v1874 = vrot.slane %v1438, %v1873
      %v1875 = vsel %vm1696, %v1874, %v1870
      %v1876 = vlaneseq
      %v1877 = vshrl.u32 %v1876, 7
      %v1878 = vsub.s32 %v1698, %v1877
      %v1879 = vrot.slane %v1439, %v1878
      %v1880 = vsel %vm1703, %v1879, %v1875
      %v1881 = vlaneseq
      %v1882 = vshrl.u32 %v1881, 7
      %v1883 = vsub.s32 %v1705, %v1882
      %v1884 = vrot.slane %v1440, %v1883
      %v1885 = vsel %vm1710, %v1884, %v1880
      %v1886 = vlaneseq
      %v1887 = vshrl.u32 %v1886, 7
      %v1888 = vsub.s32 %v1712, %v1887
      %v1889 = vrot.slane %v1441, %v1888
      %v1890 = vsel %vm1717, %v1889, %v1885
      %v1891 = vlaneseq
      %v1892 = vshrl.u32 %v1891, 7
      %v1893 = vsub.s32 %v1719, %v1892
      %v1894 = vrot.slane %v1442, %v1893
      %v1895 = vsel %vm1724, %v1894, %v1890
      %v1896 = vlaneseq
      %v1897 = vshrl.u32 %v1896, 7
      %v1898 = vsub.s32 %v1726, %v1897
      %v1899 = vrot.slane %v1443, %v1898
      %v1900 = vsel %vm1731, %v1899, %v1895
      %v1901 = vlaneseq
      %v1902 = vshrl.u32 %v1901, 7
      %v1903 = vsub.s32 %v1733, %v1902
      %v1904 = vrot.slane %v1444, %v1903
      %v1905 = vsel %vm1738, %v1904, %v1900
      %v1906 = vlaneseq
      %v1907 = vshrl.u32 %v1906, 7
      %v1908 = vsub.s32 %v1740, %v1907
      %v1909 = vrot.slane %v1445, %v1908
      %v1910 = vsel %vm1745, %v1909, %v1905
      %v1911 = vlaneseq
      %v1912 = vshrl.u32 %v1911, 7
      %v1913 = vsub.s32 %v1747, %v1912
      %v1914 = vrot.slane %v1446, %v1913
      %v1915 = vsel %vm1752, %v1914, %v1910
      %v1916 = vlaneseq
      %v1917 = vshrl.u32 %v1916, 7
      %v1918 = vsub.s32 %v1754, %v1917
      %v1919 = vrot.slane %v1447, %v1918
      %v1920 = vsel %vm1759, %v1919, %v1915
      %v1921 = vlaneseq
      %v1922 = vshrl.u32 %v1921, 7
      %v1923 = vsub.s32 %v1761, %v1922
      %v1924 = vrot.slane %v1448, %v1923
      %v1925 = vsel %vm1766, %v1924, %v1920
      %v1926 = vlaneseq
      %v1927 = vshrl.u32 %v1926, 7
      %v1928 = vsub.s32 %v1658, %v1927
      %v1929 = vrot.slane %v1449, %v1928
      %v1930 = vlaneseq
      %v1931 = vshrl.u32 %v1930, 7
      %v1932 = vsub.s32 %v1663, %v1931
      %v1933 = vrot.slane %v1450, %v1932
      %v1934 = vsel %vm1668, %v1933, %v1929
      %v1935 = vlaneseq
      %v1936 = vshrl.u32 %v1935, 7
      %v1937 = vsub.s32 %v1670, %v1936
      %v1938 = vrot.slane %v1451, %v1937
      %v1939 = vsel %vm1675, %v1938, %v1934
      %v1940 = vlaneseq
      %v1941 = vshrl.u32 %v1940, 7
      %v1942 = vsub.s32 %v1677, %v1941
      %v1943 = vrot.slane %v1452, %v1942
      %v1944 = vsel %vm1682, %v1943, %v1939
      %v1945 = vlaneseq
      %v1946 = vshrl.u32 %v1945, 7
      %v1947 = vsub.s32 %v1684, %v1946
      %v1948 = vrot.slane %v1453, %v1947
      %v1949 = vsel %vm1689, %v1948, %v1944
      %v1950 = vlaneseq
      %v1951 = vshrl.u32 %v1950, 7
      %v1952 = vsub.s32 %v1691, %v1951
      %v1953 = vrot.slane %v1454, %v1952
      %v1954 = vsel %vm1696, %v1953, %v1949
      %v1955 = vlaneseq
      %v1956 = vshrl.u32 %v1955, 7
      %v1957 = vsub.s32 %v1698, %v1956
      %v1958 = vrot.slane %v1455, %v1957
      %v1959 = vsel %vm1703, %v1958, %v1954
      %v1960 = vlaneseq
      %v1961 = vshrl.u32 %v1960, 7
      %v1962 = vsub.s32 %v1705, %v1961
      %v1963 = vrot.slane %v1456, %v1962
      %v1964 = vsel %vm1710, %v1963, %v1959
      %v1965 = vlaneseq
      %v1966 = vshrl.u32 %v1965, 7
      %v1967 = vsub.s32 %v1712, %v1966
      %v1968 = vrot.slane %v1457, %v1967
      %v1969 = vsel %vm1717, %v1968, %v1964
      %v1970 = vlaneseq
      %v1971 = vshrl.u32 %v1970, 7
      %v1972 = vsub.s32 %v1719, %v1971
      %v1973 = vrot.slane %v1458, %v1972
      %v1974 = vsel %vm1724, %v1973, %v1969
      %v1975 = vlaneseq
      %v1976 = vshrl.u32 %v1975, 7
      %v1977 = vsub.s32 %v1726, %v1976
      %v1978 = vrot.slane %v1459, %v1977
      %v1979 = vsel %vm1731, %v1978, %v1974
      %v1980 = vlaneseq
      %v1981 = vshrl.u32 %v1980, 7
      %v1982 = vsub.s32 %v1733, %v1981
      %v1983 = vrot.slane %v1460, %v1982
      %v1984 = vsel %vm1738, %v1983, %v1979
      %v1985 = vlaneseq
      %v1986 = vshrl.u32 %v1985, 7
      %v1987 = vsub.s32 %v1740, %v1986
      %v1988 = vrot.slane %v1461, %v1987
      %v1989 = vsel %vm1745, %v1988, %v1984
      %v1990 = vlaneseq
      %v1991 = vshrl.u32 %v1990, 7
      %v1992 = vsub.s32 %v1747, %v1991
      %v1993 = vrot.slane %v1462, %v1992
      %v1994 = vsel %vm1752, %v1993, %v1989
      %v1995 = vlaneseq
      %v1996 = vshrl.u32 %v1995, 7
      %v1997 = vsub.s32 %v1754, %v1996
      %v1998 = vrot.slane %v1463, %v1997
      %v1999 = vsel %vm1759, %v1998, %v1994
      %v2000 = vlaneseq
      %v2001 = vshrl.u32 %v2000, 7
      %v2002 = vsub.s32 %v1761, %v2001
      %v2003 = vrot.slane %v1464, %v2002
      %v2004 = vsel %vm1766, %v2003, %v1999
      %v2005 = vlaneseq
      %v2006 = vshrl.u32 %v2005, 7
      %v2007 = vsub.s32 %v1658, %v2006
      %v2008 = vrot.slane %v1465, %v2007
      %v2009 = vlaneseq
      %v2010 = vshrl.u32 %v2009, 7
      %v2011 = vsub.s32 %v1663, %v2010
      %v2012 = vrot.slane %v1466, %v2011
      %v2013 = vsel %vm1668, %v2012, %v2008
      %v2014 = vlaneseq
      %v2015 = vshrl.u32 %v2014, 7
      %v2016 = vsub.s32 %v1670, %v2015
      %v2017 = vrot.slane %v1467, %v2016
      %v2018 = vsel %vm1675, %v2017, %v2013
      %v2019 = vlaneseq
      %v2020 = vshrl.u32 %v2019, 7
      %v2021 = vsub.s32 %v1677, %v2020
      %v2022 = vrot.slane %v1468, %v2021
      %v2023 = vsel %vm1682, %v2022, %v2018
      %v2024 = vlaneseq
      %v2025 = vshrl.u32 %v2024, 7
      %v2026 = vsub.s32 %v1684, %v2025
      %v2027 = vrot.slane %v1469, %v2026
      %v2028 = vsel %vm1689, %v2027, %v2023
      %v2029 = vlaneseq
      %v2030 = vshrl.u32 %v2029, 7
      %v2031 = vsub.s32 %v1691, %v2030
      %v2032 = vrot.slane %v1470, %v2031
      %v2033 = vsel %vm1696, %v2032, %v2028
      %v2034 = vlaneseq
      %v2035 = vshrl.u32 %v2034, 7
      %v2036 = vsub.s32 %v1698, %v2035
      %v2037 = vrot.slane %v1471, %v2036
      %v2038 = vsel %vm1703, %v2037, %v2033
      %v2039 = vlaneseq
      %v2040 = vshrl.u32 %v2039, 7
      %v2041 = vsub.s32 %v1705, %v2040
      %v2042 = vrot.slane %v1472, %v2041
      %v2043 = vsel %vm1710, %v2042, %v2038
      %v2044 = vlaneseq
      %v2045 = vshrl.u32 %v2044, 7
      %v2046 = vsub.s32 %v1712, %v2045
      %v2047 = vrot.slane %v1473, %v2046
      %v2048 = vsel %vm1717, %v2047, %v2043
      %v2049 = vlaneseq
      %v2050 = vshrl.u32 %v2049, 7
      %v2051 = vsub.s32 %v1719, %v2050
      %v2052 = vrot.slane %v1474, %v2051
      %v2053 = vsel %vm1724, %v2052, %v2048
      %v2054 = vlaneseq
      %v2055 = vshrl.u32 %v2054, 7
      %v2056 = vsub.s32 %v1726, %v2055
      %v2057 = vrot.slane %v1475, %v2056
      %v2058 = vsel %vm1731, %v2057, %v2053
      %v2059 = vlaneseq
      %v2060 = vshrl.u32 %v2059, 7
      %v2061 = vsub.s32 %v1733, %v2060
      %v2062 = vrot.slane %v1476, %v2061
      %v2063 = vsel %vm1738, %v2062, %v2058
      %v2064 = vlaneseq
      %v2065 = vshrl.u32 %v2064, 7
      %v2066 = vsub.s32 %v1740, %v2065
      %v2067 = vrot.slane %v1477, %v2066
      %v2068 = vsel %vm1745, %v2067, %v2063
      %v2069 = vlaneseq
      %v2070 = vshrl.u32 %v2069, 7
      %v2071 = vsub.s32 %v1747, %v2070
      %v2072 = vrot.slane %v1478, %v2071
      %v2073 = vsel %vm1752, %v2072, %v2068
      %v2074 = vlaneseq
      %v2075 = vshrl.u32 %v2074, 7
      %v2076 = vsub.s32 %v1754, %v2075
      %v2077 = vrot.slane %v1479, %v2076
      %v2078 = vsel %vm1759, %v2077, %v2073
      %v2079 = vlaneseq
      %v2080 = vshrl.u32 %v2079, 7
      %v2081 = vsub.s32 %v1761, %v2080
      %v2082 = vrot.slane %v1480, %v2081
      %v2083 = vsel %vm1766, %v2082, %v2078
      %v2084 = vlaneseq
      %v2085 = vshrl.u32 %v2084, 7
      %v2086 = vsub.s32 %v1658, %v2085
      %v2087 = vrot.slane %v1481, %v2086
      %v2088 = vlaneseq
      %v2089 = vshrl.u32 %v2088, 7
      %v2090 = vsub.s32 %v1663, %v2089
      %v2091 = vrot.slane %v1482, %v2090
      %v2092 = vsel %vm1668, %v2091, %v2087
      %v2093 = vlaneseq
      %v2094 = vshrl.u32 %v2093, 7
      %v2095 = vsub.s32 %v1670, %v2094
      %v2096 = vrot.slane %v1483, %v2095
      %v2097 = vsel %vm1675, %v2096, %v2092
      %v2098 = vlaneseq
      %v2099 = vshrl.u32 %v2098, 7
      %v2100 = vsub.s32 %v1677, %v2099
      %v2101 = vrot.slane %v1484, %v2100
      %v2102 = vsel %vm1682, %v2101, %v2097
      %v2103 = vlaneseq
      %v2104 = vshrl.u32 %v2103, 7
      %v2105 = vsub.s32 %v1684, %v2104
      %v2106 = vrot.slane %v1485, %v2105
      %v2107 = vsel %vm1689, %v2106, %v2102
      %v2108 = vlaneseq
      %v2109 = vshrl.u32 %v2108, 7
      %v2110 = vsub.s32 %v1691, %v2109
      %v2111 = vrot.slane %v1486, %v2110
      %v2112 = vsel %vm1696, %v2111, %v2107
      %v2113 = vlaneseq
      %v2114 = vshrl.u32 %v2113, 7
      %v2115 = vsub.s32 %v1698, %v2114
      %v2116 = vrot.slane %v1487, %v2115
      %v2117 = vsel %vm1703, %v2116, %v2112
      %v2118 = vlaneseq
      %v2119 = vshrl.u32 %v2118, 7
      %v2120 = vsub.s32 %v1705, %v2119
      %v2121 = vrot.slane %v1488, %v2120
      %v2122 = vsel %vm1710, %v2121, %v2117
      %v2123 = vlaneseq
      %v2124 = vshrl.u32 %v2123, 7
      %v2125 = vsub.s32 %v1712, %v2124
      %v2126 = vrot.slane %v1489, %v2125
      %v2127 = vsel %vm1717, %v2126, %v2122
      %v2128 = vlaneseq
      %v2129 = vshrl.u32 %v2128, 7
      %v2130 = vsub.s32 %v1719, %v2129
      %v2131 = vrot.slane %v1490, %v2130
      %v2132 = vsel %vm1724, %v2131, %v2127
      %v2133 = vlaneseq
      %v2134 = vshrl.u32 %v2133, 7
      %v2135 = vsub.s32 %v1726, %v2134
      %v2136 = vrot.slane %v1491, %v2135
      %v2137 = vsel %vm1731, %v2136, %v2132
      %v2138 = vlaneseq
      %v2139 = vshrl.u32 %v2138, 7
      %v2140 = vsub.s32 %v1733, %v2139
      %v2141 = vrot.slane %v1492, %v2140
      %v2142 = vsel %vm1738, %v2141, %v2137
      %v2143 = vlaneseq
      %v2144 = vshrl.u32 %v2143, 7
      %v2145 = vsub.s32 %v1740, %v2144
      %v2146 = vrot.slane %v1493, %v2145
      %v2147 = vsel %vm1745, %v2146, %v2142
      %v2148 = vlaneseq
      %v2149 = vshrl.u32 %v2148, 7
      %v2150 = vsub.s32 %v1747, %v2149
      %v2151 = vrot.slane %v1494, %v2150
      %v2152 = vsel %vm1752, %v2151, %v2147
      %v2153 = vlaneseq
      %v2154 = vshrl.u32 %v2153, 7
      %v2155 = vsub.s32 %v1754, %v2154
      %v2156 = vrot.slane %v1495, %v2155
      %v2157 = vsel %vm1759, %v2156, %v2152
      %v2158 = vlaneseq
      %v2159 = vshrl.u32 %v2158, 7
      %v2160 = vsub.s32 %v1761, %v2159
      %v2161 = vrot.slane %v1496, %v2160
      %v2162 = vsel %vm1766, %v2161, %v2157
      %v2163 = vlaneseq
      %v2164 = vshrl.u32 %v2163, 7
      %v2165 = vsub.s32 %v1658, %v2164
      %v2166 = vrot.slane %v1497, %v2165
      %v2167 = vlaneseq
      %v2168 = vshrl.u32 %v2167, 7
      %v2169 = vsub.s32 %v1663, %v2168
      %v2170 = vrot.slane %v1498, %v2169
      %v2171 = vsel %vm1668, %v2170, %v2166
      %v2172 = vlaneseq
      %v2173 = vshrl.u32 %v2172, 7
      %v2174 = vsub.s32 %v1670, %v2173
      %v2175 = vrot.slane %v1499, %v2174
      %v2176 = vsel %vm1675, %v2175, %v2171
      %v2177 = vlaneseq
      %v2178 = vshrl.u32 %v2177, 7
      %v2179 = vsub.s32 %v1677, %v2178
      %v2180 = vrot.slane %v1500, %v2179
      %v2181 = vsel %vm1682, %v2180, %v2176
      %v2182 = vlaneseq
      %v2183 = vshrl.u32 %v2182, 7
      %v2184 = vsub.s32 %v1684, %v2183
      %v2185 = vrot.slane %v1501, %v2184
      %v2186 = vsel %vm1689, %v2185, %v2181
      %v2187 = vlaneseq
      %v2188 = vshrl.u32 %v2187, 7
      %v2189 = vsub.s32 %v1691, %v2188
      %v2190 = vrot.slane %v1502, %v2189
      %v2191 = vsel %vm1696, %v2190, %v2186
      %v2192 = vlaneseq
      %v2193 = vshrl.u32 %v2192, 7
      %v2194 = vsub.s32 %v1698, %v2193
      %v2195 = vrot.slane %v1503, %v2194
      %v2196 = vsel %vm1703, %v2195, %v2191
      %v2197 = vlaneseq
      %v2198 = vshrl.u32 %v2197, 7
      %v2199 = vsub.s32 %v1705, %v2198
      %v2200 = vrot.slane %v1504, %v2199
      %v2201 = vsel %vm1710, %v2200, %v2196
      %v2202 = vlaneseq
      %v2203 = vshrl.u32 %v2202, 7
      %v2204 = vsub.s32 %v1712, %v2203
      %v2205 = vrot.slane %v1505, %v2204
      %v2206 = vsel %vm1717, %v2205, %v2201
      %v2207 = vlaneseq
      %v2208 = vshrl.u32 %v2207, 7
      %v2209 = vsub.s32 %v1719, %v2208
      %v2210 = vrot.slane %v1506, %v2209
      %v2211 = vsel %vm1724, %v2210, %v2206
      %v2212 = vlaneseq
      %v2213 = vshrl.u32 %v2212, 7
      %v2214 = vsub.s32 %v1726, %v2213
      %v2215 = vrot.slane %v1507, %v2214
      %v2216 = vsel %vm1731, %v2215, %v2211
      %v2217 = vlaneseq
      %v2218 = vshrl.u32 %v2217, 7
      %v2219 = vsub.s32 %v1733, %v2218
      %v2220 = vrot.slane %v1508, %v2219
      %v2221 = vsel %vm1738, %v2220, %v2216
      %v2222 = vlaneseq
      %v2223 = vshrl.u32 %v2222, 7
      %v2224 = vsub.s32 %v1740, %v2223
      %v2225 = vrot.slane %v1509, %v2224
      %v2226 = vsel %vm1745, %v2225, %v2221
      %v2227 = vlaneseq
      %v2228 = vshrl.u32 %v2227, 7
      %v2229 = vsub.s32 %v1747, %v2228
      %v2230 = vrot.slane %v1510, %v2229
      %v2231 = vsel %vm1752, %v2230, %v2226
      %v2232 = vlaneseq
      %v2233 = vshrl.u32 %v2232, 7
      %v2234 = vsub.s32 %v1754, %v2233
      %v2235 = vrot.slane %v1511, %v2234
      %v2236 = vsel %vm1759, %v2235, %v2231
      %v2237 = vlaneseq
      %v2238 = vshrl.u32 %v2237, 7
      %v2239 = vsub.s32 %v1761, %v2238
      %v2240 = vrot.slane %v1512, %v2239
      %v2241 = vsel %vm1766, %v2240, %v2236
      %v2242 = vlaneseq
      %v2243 = vshrl.u32 %v2242, 7
      %v2244 = vsub.s32 %v1658, %v2243
      %v2245 = vrot.slane %v1513, %v2244
      %v2246 = vlaneseq
      %v2247 = vshrl.u32 %v2246, 7
      %v2248 = vsub.s32 %v1663, %v2247
      %v2249 = vrot.slane %v1514, %v2248
      %v2250 = vsel %vm1668, %v2249, %v2245
      %v2251 = vlaneseq
      %v2252 = vshrl.u32 %v2251, 7
      %v2253 = vsub.s32 %v1670, %v2252
      %v2254 = vrot.slane %v1515, %v2253
      %v2255 = vsel %vm1675, %v2254, %v2250
      %v2256 = vlaneseq
      %v2257 = vshrl.u32 %v2256, 7
      %v2258 = vsub.s32 %v1677, %v2257
      %v2259 = vrot.slane %v1516, %v2258
      %v2260 = vsel %vm1682, %v2259, %v2255
      %v2261 = vlaneseq
      %v2262 = vshrl.u32 %v2261, 7
      %v2263 = vsub.s32 %v1684, %v2262
      %v2264 = vrot.slane %v1517, %v2263
      %v2265 = vsel %vm1689, %v2264, %v2260
      %v2266 = vlaneseq
      %v2267 = vshrl.u32 %v2266, 7
      %v2268 = vsub.s32 %v1691, %v2267
      %v2269 = vrot.slane %v1518, %v2268
      %v2270 = vsel %vm1696, %v2269, %v2265
      %v2271 = vlaneseq
      %v2272 = vshrl.u32 %v2271, 7
      %v2273 = vsub.s32 %v1698, %v2272
      %v2274 = vrot.slane %v1519, %v2273
      %v2275 = vsel %vm1703, %v2274, %v2270
      %v2276 = vlaneseq
      %v2277 = vshrl.u32 %v2276, 7
      %v2278 = vsub.s32 %v1705, %v2277
      %v2279 = vrot.slane %v1520, %v2278
      %v2280 = vsel %vm1710, %v2279, %v2275
      %v2281 = vlaneseq
      %v2282 = vshrl.u32 %v2281, 7
      %v2283 = vsub.s32 %v1712, %v2282
      %v2284 = vrot.slane %v1521, %v2283
      %v2285 = vsel %vm1717, %v2284, %v2280
      %v2286 = vlaneseq
      %v2287 = vshrl.u32 %v2286, 7
      %v2288 = vsub.s32 %v1719, %v2287
      %v2289 = vrot.slane %v1522, %v2288
      %v2290 = vsel %vm1724, %v2289, %v2285
      %v2291 = vlaneseq
      %v2292 = vshrl.u32 %v2291, 7
      %v2293 = vsub.s32 %v1726, %v2292
      %v2294 = vrot.slane %v1523, %v2293
      %v2295 = vsel %vm1731, %v2294, %v2290
      %v2296 = vlaneseq
      %v2297 = vshrl.u32 %v2296, 7
      %v2298 = vsub.s32 %v1733, %v2297
      %v2299 = vrot.slane %v1524, %v2298
      %v2300 = vsel %vm1738, %v2299, %v2295
      %v2301 = vlaneseq
      %v2302 = vshrl.u32 %v2301, 7
      %v2303 = vsub.s32 %v1740, %v2302
      %v2304 = vrot.slane %v1525, %v2303
      %v2305 = vsel %vm1745, %v2304, %v2300
      %v2306 = vlaneseq
      %v2307 = vshrl.u32 %v2306, 7
      %v2308 = vsub.s32 %v1747, %v2307
      %v2309 = vrot.slane %v1526, %v2308
      %v2310 = vsel %vm1752, %v2309, %v2305
      %v2311 = vlaneseq
      %v2312 = vshrl.u32 %v2311, 7
      %v2313 = vsub.s32 %v1754, %v2312
      %v2314 = vrot.slane %v1527, %v2313
      %v2315 = vsel %vm1759, %v2314, %v2310
      %v2316 = vlaneseq
      %v2317 = vshrl.u32 %v2316, 7
      %v2318 = vsub.s32 %v1761, %v2317
      %v2319 = vrot.slane %v1528, %v2318
      %v2320 = vsel %vm1766, %v2319, %v2315
      %v2321 = vsel %vm1121, %v1846, %v1767
      %v2322 = vsel %vm1123, %v1925, %v2321
      %v2323 = vsel %vm1125, %v2004, %v2322
      %v2324 = vsel %vm1127, %v2083, %v2323
      %v2325 = vsel %vm1129, %v2162, %v2324
      %v2326 = vsel %vm1131, %v2241, %v2325
      %v2327 = vsel %vm1133, %v2320, %v2326
      %v2329 = vadd.f32 %v1144, %v2327
      %2330 = vst [vmem:[%s1143] sm:$0xff] %v2329
    $region21: #{tpu_custom_call.1} parent=1 // pred_fallthru
      _
    // Predicated region
    $region22: #{tpu_custom_call.1} parent=1 // pred_check
      %p2331 = pneg %p49
    $region23: #{tpu_custom_call.1} parent=1 // pred_check_branch
      %2333 = sbr.rel (%p2331) target = $region25
    $region24: #{tpu_custom_call.1} parent=1 // pred_region
      %v2334 = vld [vmem:[#allocation2] sm:$0xff]
      %v2335 = vmul.f32 %v2334, 0.5
      %v2336 = vadd.f32 %v2335, 65.0
      %2337 = vst [vmem:[#allocation9] sm:$0xff] %v2336
    $region25: #{tpu_custom_call.1} parent=1 // pred_fallthru
      _
    // Predicated region
    $region26: #{tpu_custom_call.1} parent=1 // pred_check
      _
    $region27: #{tpu_custom_call.1} parent=1 // pred_check_branch
      %2339 = sbr.rel (0) target = $region29
    $region28: #{tpu_custom_call.1} parent=1 // pred_region
      %s2341 = ssub.s32 128, 128
      %2342 = vsyncadd [#allocation8], %s2341
      %s2344 = sshll.u32 [#allocation9], 4
      %s2345 = int_to_ptr.vmem [resolvable:$true] %s2344
      %2347 = dma.vmem_to_hbm [thread:$0]  %s2345, 128, %s4, [#allocation8]
    $region29: #{tpu_custom_call.1} parent=1 // pred_fallthru
      _
    // Predicated region
    $region30: #{tpu_custom_call.1} parent=1 // pred_check
      _
    $region31: #{tpu_custom_call.1} parent=1 // pred_check_branch
      %2349 = sbr.rel (0) target = $region33
    $region32: #{tpu_custom_call.1} parent=1 // pred_region
      %2350 = dma.done [#allocation8], 128
    $region33: #{tpu_custom_call.1} parent=1 // pred_fallthru
      _
    %2351 = vsyncpa [#allocation7], 1
    %2352 = vsyncpa [#allocation8], 1

</llo_original>
